<compile_context>
chip_gen: v7x
topology: tpu7x:2x2x1
jax: 0.10.0
libtpu: 0.0.40
codegen_flags: <defaults>
</compile_context>

<pallas_src>
import functools
import math

import jax
import jax.numpy as jnp
from jax import lax
from jax.experimental import pallas as pl
from jax.experimental.pallas import tpu as pltpu


# --------------------------------------------------------------------------
# Helpers
# --------------------------------------------------------------------------
def _round_up(n, m):
    return (n + m - 1) // m * m


def _cdiv(a, b):
    return -(-a // b)


def _vmem_limit_bytes():
    # Leave headroom for Mosaic internal scratch / semaphores / double buffers.
    try:
        cap = int(pltpu.get_tpu_info().vmem_capacity_bytes)
    except Exception:
        return 64 * 1024 * 1024
    return max(32 * 1024 * 1024, min(cap - 16 * 1024 * 1024, 100 * 1024 * 1024))


def _auto_batch_tile(B, D, itemsize):
    # Keep the resident x tile around <= 8 MiB; prefer a single batch tile so
    # the weight matrix is streamed exactly once through the LM pass.
    rows = (8 * 1024 * 1024) // max(1, D * itemsize)
    rows = max(8, min(1024, rows - rows % 8))
    return B if B <= rows else rows


# --------------------------------------------------------------------------
# Pre-pass over W (one streaming pass):
#   wn       = F.normalize(W, dim=1)        -> bf16 (consumed by the loss pass)
#   inv_wnorm = 1 / max(||w_c||, sqrt(eps)) -> (1, C) f32, lane-major
# --------------------------------------------------------------------------
def _weight_prep_kernel(w_ref, wn_ref, invw_ref, *, eps):
    wf = w_ref[...].astype(jnp.float32)                          # (tC, D)
    wsq = wf * wf
    nsq_col = jnp.sum(wsq, axis=1, keepdims=True)                # (tC, 1)
    inv_col = lax.rsqrt(jnp.maximum(nsq_col, 1e-24))             # F.normalize eps=1e-12
    wn_ref[...] = (wf * inv_col).astype(wn_ref.dtype)
    # Same norms in lane-major (1, tC) layout via a tiny ones @ wsq^T
    # contraction (avoids any XLU transpose downstream).
    ones = jnp.ones((8, wf.shape[1]), jnp.float32)
    nsq_row = lax.dot_general(ones, wsq,
                              dimension_numbers=(((1,), (1,)), ((), ())),
                              preferred_element_type=jnp.float32)  # (8, tC)
    invw_ref[...] = lax.rsqrt(jnp.maximum(nsq_row[0:1, :], eps))   # (1, tC)


# --------------------------------------------------------------------------
# LM logits: s * (cosine_sim(x, W) - m * one_hot(label)), tiled over (B, C).
# --------------------------------------------------------------------------
def _lm_kernel(x_ref, w_ref, invw_ref, label_ref, lm_ref, inv_xn_ref, *,
               s, sm, eps, block_c):
    j = pl.program_id(1)

    @pl.when(j == 0)
    def _():
        xf = x_ref[...].astype(jnp.float32)
        nsq = jnp.sum(xf * xf, axis=1, keepdims=True)            # (tB, 1)
        # s folded into the cached inverse norm (saves a full-tile multiply).
        inv_xn_ref[...] = s * lax.rsqrt(jnp.maximum(nsq, eps))

    ip = lax.dot_general(x_ref[...], w_ref[...],
                         dimension_numbers=(((1,), (1,)), ((), ())),
                         preferred_element_type=jnp.float32)      # (tB, tC)
    t = ip * inv_xn_ref[...] * invw_ref[...]                      # == s * cosine
    cols = block_c * j + lax.broadcasted_iota(jnp.int32, t.shape, 1)
    lm_ref[...] = jnp.where(cols == label_ref[...], t - sm, t).astype(lm_ref.dtype)


# --------------------------------------------------------------------------
# Regular loss building block: for pair p = (row tile ti, col tile tj) of the
# upper block-triangle, compute clip(wn_i wn_j^T, -1, 1), mask diagonal /
# out-of-range classes, and emit
#   colfold[p] = max over rows   (contribution to colmax of tj's classes)
#   rowfold[p] = max over cols   (contribution, via symmetry, to ti's classes)
# No cross-step state -> the single grid axis is megacore "parallel".
# --------------------------------------------------------------------------
def _regular_loss_kernel(pair_i_ref, pair_j_ref, wn_row_ref, wn_col_ref,
                         colfold_ref, rowfold_ref, *, n_classes, block_r, block_c):
    p = pl.program_id(0)
    ti = pair_i_ref[p]
    tj = pair_j_ref[p]

    blk = lax.dot_general(wn_row_ref[...], wn_col_ref[...],
                          dimension_numbers=(((1,), (1,)), ((), ())),
                          preferred_element_type=jnp.float32)     # (tR, tCc)
    blk = jnp.clip(blk, -1.0, 1.0)                                # clip BEFORE masking

    rows = ti * block_r + lax.broadcasted_iota(jnp.int32, blk.shape, 0)
    cols = tj * block_c + lax.broadcasted_iota(jnp.int32, blk.shape, 1)
    valid = (rows != cols) & (rows < n_classes) & (cols < n_classes)
    blk = jnp.where(valid, blk, -jnp.inf)

    colfold_ref[...] = jnp.max(blk, axis=0, keepdims=True)[None]  # (1, 1, tCc)
    rowfold_ref[...] = jnp.max(blk, axis=1, keepdims=True)[None]  # (1, tR, 1)


# --------------------------------------------------------------------------
# Wrapper
# --------------------------------------------------------------------------
def lm_regular_product(x, weight, label, *, scale=30.0, m=0.4, factor=5, eps=1e-8,
                       block_b=None, block_c=None,
                       loss_block_r=256, loss_block_c=768):
    B, D = x.shape
    C, D2 = weight.shape
    assert D == D2, "in_features mismatch"
    assert C >= 2, "regular loss needs at least 2 classes"

    vmem_limit = _vmem_limit_bytes()
    cap = _round_up(C, 128)

    # ---- tile choices -------------------------------------------------------
    if block_b is None:
        tB = _auto_batch_tile(B, D, x.dtype.itemsize)
    else:
        tB = B if block_b >= B else max(8, block_b - block_b % 8)
    tC = min(_round_up(block_c, 128) if block_c is not None else 512, cap)

    tR = min(_round_up(loss_block_r, 128), cap)
    tCc = min(_round_up(loss_block_c, 128), cap)
    # Keep the double-buffered bf16 wn tiles comfortably inside VMEM.
    while 2 * (tR + tCc) * D * 2 > 24 * 1024 * 1024 and (tR > 128 or tCc > 128):
        if tCc >= tR and tCc > 128:
            tCc //= 2
        else:
            tR //= 2

    n_b = _cdiv(B, tB)
    n_c = _cdiv(C, tC)
    n_ri = _cdiv(C, tR)
    n_cj = _cdiv(C, tCc)

    lbl = label.reshape(-1, 1).astype(jnp.int32)

    # ---- pre-pass over W: normalized rows (bf16) + lane-major 1/||w|| -------
    wn, inv_wnorm = pl.pallas_call(
        functools.partial(_weight_prep_kernel, eps=float(eps)),
        grid=(n_c,),
        in_specs=[pl.BlockSpec((tC, D), lambda j: (j, 0))],
        out_specs=(pl.BlockSpec((tC, D), lambda j: (j, 0)),
                   pl.BlockSpec((1, tC), lambda j: (0, j))),
        out_shape=(jax.ShapeDtypeStruct((C, D), jnp.bfloat16),
                   jax.ShapeDtypeStruct((1, C), jnp.float32)),
        compiler_params=pltpu.CompilerParams(
            dimension_semantics=("parallel",),
            vmem_limit_bytes=vmem_limit),
    )(weight)

    # ---- LM logits, tiled over (B, C); W streamed once when n_b == 1 --------
    lm = pl.pallas_call(
        functools.partial(_lm_kernel, s=float(scale), sm=float(scale) * float(m),
                          eps=float(eps), block_c=tC),
        grid=(n_b, n_c),
        in_specs=[
            pl.BlockSpec((tB, D), lambda i, j: (i, 0)),      # x (resident per i)
            pl.BlockSpec((tC, D), lambda i, j: (j, 0)),      # raw weight tile
            pl.BlockSpec((1, tC), lambda i, j: (0, j)),      # 1/||w|| (lane-major)
            pl.BlockSpec((tB, 1), lambda i, j: (i, 0)),      # labels
        ],
        out_specs=pl.BlockSpec((tB, tC), lambda i, j: (i, j)),
        out_shape=jax.ShapeDtypeStruct((B, C), x.dtype),
        scratch_shapes=[pltpu.VMEM((tB, 1), jnp.float32)],   # cached s/||x||
        compiler_params=pltpu.CompilerParams(
            dimension_semantics=("parallel", "arbitrary"),
            vmem_limit_bytes=vmem_limit),
    )(x, weight, inv_wnorm, lbl)

    # ---- regular loss: upper block-triangle of (row tile, col tile) pairs ---
    # Coverage: every off-diagonal element (r, c) appears (possibly mirrored)
    # in at least one enumerated block; max-folding is idempotent, so overlap
    # is harmless. Ordering j-outer keeps the big column tile resident.
    pi_list, pj_list = [], []
    for j in range(n_cj):
        col_end = (j + 1) * tCc
        for i in range(n_ri):
            if i * tR < col_end:
                pi_list.append(i)
                pj_list.append(j)
    n_pairs = len(pi_list)
    pair_i = jnp.asarray(pi_list, dtype=jnp.int32)
    pair_j = jnp.asarray(pj_list, dtype=jnp.int32)

    colfold, rowfold = pl.pallas_call(
        functools.partial(_regular_loss_kernel, n_classes=C,
                          block_r=tR, block_c=tCc),
        grid_spec=pltpu.PrefetchScalarGridSpec(
            num_scalar_prefetch=2,
            grid=(n_pairs,),
            in_specs=[
                pl.BlockSpec((tR, D), lambda p, pi, pj: (pi[p], 0)),   # streamed rows
                pl.BlockSpec((tCc, D), lambda p, pi, pj: (pj[p], 0)),  # resident cols
            ],
            out_specs=(
                pl.BlockSpec((1, 1, tCc), lambda p, pi, pj: (p, 0, 0)),
                pl.BlockSpec((1, tR, 1), lambda p, pi, pj: (p, 0, 0)),
            ),
        ),
        out_shape=(jax.ShapeDtypeStruct((n_pairs, 1, tCc), jnp.float32),
                   jax.ShapeDtypeStruct((n_pairs, tR, 1), jnp.float32)),
        compiler_params=pltpu.CompilerParams(
            dimension_semantics=("parallel",),
            vmem_limit_bytes=vmem_limit),
    )(pair_i, pair_j, wn, wn)

    # Tiny wrapper-side combine (O(C^2 / tile) elements, ~1% of kernel traffic):
    col_part = jax.ops.segment_max(colfold.reshape(n_pairs, tCc), pair_j,
                                   num_segments=n_cj, indices_are_sorted=True)
    row_part = jax.ops.segment_max(rowfold.reshape(n_pairs, tR), pair_i,
                                   num_segments=n_ri)
    colmax = jnp.maximum(col_part.reshape(-1)[:C], row_part.reshape(-1)[:C])
    loss = jnp.sum(colmax) * (float(factor) / C)

    return lm, loss


# --------------------------------------------------------------------------
# Pure-JAX reference (mirrors the PyTorch module math) for a sanity check
# --------------------------------------------------------------------------
def _reference(x, w, label, s, m, factor, eps):
    xf = x.astype(jnp.float32)
    wf = w.astype(jnp.float32)
    hi = jax.lax.Precision.HIGHEST
    ip = jnp.dot(xf, wf.T, precision=hi)
    xn = jnp.sqrt(jnp.sum(xf * xf, axis=1))
    wn = jnp.sqrt(jnp.sum(wf * wf, axis=1))
    cosine = ip / jnp.maximum(jnp.outer(xn, wn), eps)
    C = w.shape[0]
    one_hot = jax.nn.one_hot(label, C, dtype=jnp.float32)
    lm = s * (cosine - one_hot * m)
    wnorm = wf / jnp.maximum(wn[:, None], 1e-12)
    cos = jnp.clip(jnp.dot(wnorm, wnorm.T, precision=hi), -1.0, 1.0)
    cos_cp = jnp.where(jnp.eye(C, dtype=bool), -100.0, cos)
    idx = jnp.argmax(cos_cp, axis=0)
    loss = jnp.sum(cos[jnp.arange(C), idx]) / C * factor
    return lm, loss


if __name__ == "__main__":
    key = jax.random.PRNGKey(0)
    B, in_features, out_features = 32, 128, 256
    kx, kw, kl = jax.random.split(key, 3)

    x = jax.random.normal(kx, (B, in_features), dtype=jnp.float32)
    stdv = 1.0 / math.sqrt(in_features)  # matches nn.init.uniform_(weight, -stdv, stdv)
    weight = jax.random.uniform(kw, (out_features, in_features),
                                minval=-stdv, maxval=stdv, dtype=jnp.float32)
    label = jax.random.randint(kl, (B,), 0, out_features, dtype=jnp.int32)

    fwd = jax.jit(functools.partial(lm_regular_product,
                                    scale=30.0, m=0.4, factor=5))
    lm_out, reg_loss = fwd(x, weight, label)
    jax.block_until_ready((lm_out, reg_loss))

    assert lm_out.shape == (B, out_features)
    assert reg_loss.shape == ()

    lm_want, loss_want = _reference(x, weight, label, 30.0, 0.4, 5.0, 1e-8)
    assert bool(jnp.allclose(lm_out, lm_want, atol=2e-1)), "lm_output mismatch"
    assert bool(jnp.allclose(reg_loss, loss_want, atol=5e-2)), "regular_loss mismatch"

    print("KERNEL_OK")
</pallas_src>

<mosaic_0001>
module attributes {stable_mosaic.version = 11 : i64} {
  func.func @_regular_loss_kernel(%arg0: i32, %arg1: memref<1xi32, #tpu.memory_space<smem>>, %arg2: memref<1xi32, #tpu.memory_space<smem>>, %arg3: memref<256x128xbf16, #tpu.memory_space<vmem>>, %arg4: memref<256x128xbf16, #tpu.memory_space<vmem>>, %arg5: memref<1x1x256xf32, #tpu.memory_space<vmem>>, %arg6: memref<1x256x1xf32, #tpu.memory_space<vmem>>) attributes {dimension_semantics = [#tpu.dimension_semantics<parallel>], iteration_bounds = array<i64: 1>, scalar_prefetch = 2 : i64, scratch_operands = 0 : i64, tpu.core_type = #tpu.core_type<tc>, window_params = [{transform_indices = @transform_0, window_bounds = array<i64: 256, 128>}, {transform_indices = @transform_1, window_bounds = array<i64: 256, 128>}, {transform_indices = @transform_2, window_bounds = array<i64: 1, 1, 256>}, {transform_indices = @transform_3, window_bounds = array<i64: 1, 256, 1>}]} {
    %0 = arith.index_cast %arg0 : i32 to index
    %1 = memref.load %arg1[%0] : memref<1xi32, #tpu.memory_space<smem>>
    %2 = arith.index_cast %arg0 : i32 to index
    %3 = memref.load %arg2[%2] : memref<1xi32, #tpu.memory_space<smem>>
    %c0 = arith.constant 0 : index
    %c0_0 = arith.constant 0 : index
    %4 = vector.load %arg3[%c0, %c0_0] : memref<256x128xbf16, #tpu.memory_space<vmem>>, vector<256x128xbf16>
    %c0_1 = arith.constant 0 : index
    %c0_2 = arith.constant 0 : index
    %5 = vector.load %arg4[%c0_1, %c0_2] : memref<256x128xbf16, #tpu.memory_space<vmem>>, vector<256x128xbf16>
    %cst = arith.constant dense<0.000000e+00> : vector<256x256xf32>
    %6 = tpu.matmul %4, %5, %cst {dimension_numbers = #tpu.dot_dimension_numbers<[1], [1], [0], [0], [0, 0, 1, 0], [], []>} : vector<256x128xbf16>, vector<256x128xbf16>, vector<256x256xf32> -> vector<256x256xf32>
    %cst_3 = arith.constant -1.000000e+00 : f32
    %cst_4 = arith.constant 1.000000e+00 : f32
    %7 = vector.broadcast %cst_3 : f32 to vector<256x256xf32>
    %8 = arith.maximumf %7, %6 : vector<256x256xf32>
    %9 = vector.broadcast %cst_4 : f32 to vector<256x256xf32>
    %10 = arith.minimumf %9, %8 : vector<256x256xf32>
    %c256_i32 = arith.constant 256 : i32
    %11 = arith.muli %1, %c256_i32 : i32
    %12 = tpu.iota {dimensions = array<i32: 0>} : vector<256x256xi32>
    %13 = vector.broadcast %11 : i32 to vector<256x256xi32>
    %14 = arith.addi %13, %12 : vector<256x256xi32>
    %c256_i32_5 = arith.constant 256 : i32
    %15 = arith.muli %3, %c256_i32_5 : i32
    %16 = tpu.iota {dimensions = array<i32: 1>} : vector<256x256xi32>
    %17 = vector.broadcast %15 : i32 to vector<256x256xi32>
    %18 = arith.addi %17, %16 : vector<256x256xi32>
    %19 = arith.cmpi ne, %14, %18 : vector<256x256xi32>
    %c256_i32_6 = arith.constant 256 : i32
    %20 = vector.broadcast %c256_i32_6 : i32 to vector<256x256xi32>
    %21 = arith.cmpi slt, %14, %20 : vector<256x256xi32>
    %22 = arith.andi %19, %21 : vector<256x256xi1>
    %c256_i32_7 = arith.constant 256 : i32
    %23 = vector.broadcast %c256_i32_7 : i32 to vector<256x256xi32>
    %24 = arith.cmpi slt, %18, %23 : vector<256x256xi32>
    %25 = arith.andi %22, %24 : vector<256x256xi1>
    %cst_8 = arith.constant 0xFF800000 : f32
    %26 = vector.broadcast %cst_8 : f32 to vector<256x256xf32>
    %27 = arith.select %25, %10, %26 : vector<256x256xi1>, vector<256x256xf32>
    %cst_9 = arith.constant dense<0xFF800000> : vector<256xf32>
    %28 = vector.multi_reduction <maximumf>, %27, %cst_9 [0] : vector<256x256xf32> to vector<256xf32>
    %29 = vector.shape_cast %28 : vector<256xf32> to vector<1x256xf32>
    %30 = vector.shape_cast %29 : vector<1x256xf32> to vector<1x1x256xf32>
    %c0_10 = arith.constant 0 : index
    %c0_11 = arith.constant 0 : index
    %c0_12 = arith.constant 0 : index
    %31 = vector.load %arg5[%c0_10, %c0_11, %c0_12] : memref<1x1x256xf32, #tpu.memory_space<vmem>>, vector<1x1x256xf32>
    tpu.vector_store %arg5[%c0_10, %c0_11, %c0_12], %30 {strides = array<i32>} : memref<1x1x256xf32, #tpu.memory_space<vmem>>, vector<1x1x256xf32>,
    %cst_13 = arith.constant dense<0xFF800000> : vector<256xf32>
    %32 = vector.multi_reduction <maximumf>, %27, %cst_13 [1] : vector<256x256xf32> to vector<256xf32>
    %33 = vector.shape_cast %32 : vector<256xf32> to vector<256x1xf32>
    %34 = vector.shape_cast %33 : vector<256x1xf32> to vector<1x256x1xf32>
    %c0_14 = arith.constant 0 : index
    %c0_15 = arith.constant 0 : index
    %c0_16 = arith.constant 0 : index
    %35 = vector.load %arg6[%c0_14, %c0_15, %c0_16] : memref<1x256x1xf32, #tpu.memory_space<vmem>>, vector<1x256x1xf32>
    tpu.vector_store %arg6[%c0_14, %c0_15, %c0_16], %34 {strides = array<i32>} : memref<1x256x1xf32, #tpu.memory_space<vmem>>, vector<1x256x1xf32>,
    return
  }
  func.func @transform_0(%arg0: i32, %arg1: memref<1xi32, #tpu.memory_space<smem>>, %arg2: memref<1xi32, #tpu.memory_space<smem>>) -> (i32, i32) {
    %0 = arith.index_cast %arg0 : i32 to index
    %1 = memref.load %arg1[%0] : memref<1xi32, #tpu.memory_space<smem>>
    %c0_i32 = arith.constant 0 : i32
    %c0_i32_0 = arith.constant 0 : i32
    return %1, %c0_i32 : i32, i32
  }
  func.func @transform_1(%arg0: i32, %arg1: memref<1xi32, #tpu.memory_space<smem>>, %arg2: memref<1xi32, #tpu.memory_space<smem>>) -> (i32, i32) {
    %0 = arith.index_cast %arg0 : i32 to index
    %1 = memref.load %arg2[%0] : memref<1xi32, #tpu.memory_space<smem>>
    %c0_i32 = arith.constant 0 : i32
    %c0_i32_0 = arith.constant 0 : i32
    return %1, %c0_i32 : i32, i32
  }
  func.func @transform_2(%arg0: i32, %arg1: memref<1xi32, #tpu.memory_space<smem>>, %arg2: memref<1xi32, #tpu.memory_space<smem>>) -> (i32, i32, i32) {
    %c0_i32 = arith.constant 0 : i32
    %c0_i32_0 = arith.constant 0 : i32
    %c0_i32_1 = arith.constant 0 : i32
    return %arg0, %c0_i32, %c0_i32_0 : i32, i32, i32
  }
  func.func @transform_3(%arg0: i32, %arg1: memref<1xi32, #tpu.memory_space<smem>>, %arg2: memref<1xi32, #tpu.memory_space<smem>>) -> (i32, i32, i32) {
    %c0_i32 = arith.constant 0 : i32
    %c0_i32_0 = arith.constant 0 : i32
    %c0_i32_1 = arith.constant 0 : i32
    return %arg0, %c0_i32, %c0_i32_0 : i32, i32, i32
  }
}

module attributes {stable_mosaic.version = 11 : i64} {
  func.func @_weight_prep_kernel(%arg0: i32, %arg1: memref<256x128xf32, #tpu.memory_space<vmem>>, %arg2: memref<256x128xbf16, #tpu.memory_space<vmem>>, %arg3: memref<1x256xf32, #tpu.memory_space<vmem>>) attributes {dimension_semantics = [#tpu.dimension_semantics<parallel>], iteration_bounds = array<i64: 1>, scalar_prefetch = 0 : i64, scratch_operands = 0 : i64, tpu.core_type = #tpu.core_type<tc>, window_params = [{transform_indices = @transform_0, window_bounds = array<i64: 256, 128>}, {transform_indices = @transform_1, window_bounds = array<i64: 256, 128>}, {transform_indices = @transform_2, window_bounds = array<i64: 1, 256>}]} {
    %c0 = arith.constant 0 : index
    %c0_0 = arith.constant 0 : index
    %0 = vector.load %arg1[%c0, %c0_0] : memref<256x128xf32, #tpu.memory_space<vmem>>, vector<256x128xf32>
    %1 = arith.mulf %0, %0 : vector<256x128xf32>
    %cst = arith.constant dense<0.000000e+00> : vector<256xf32>
    %2 = vector.multi_reduction <add>, %1, %cst [1] : vector<256x128xf32> to vector<256xf32>
    %3 = vector.shape_cast %2 : vector<256xf32> to vector<256x1xf32>
    %cst_1 = arith.constant 1.000000e-24 : f32
    %4 = vector.broadcast %cst_1 : f32 to vector<256x1xf32>
    %5 = arith.maximumf %3, %4 : vector<256x1xf32>
    %6 = math.rsqrt %5 : vector<256x1xf32>
    %7 = vector.broadcast %6 : vector<256x1xf32> to vector<256x128xf32>
    %8 = arith.mulf %0, %7 : vector<256x128xf32>
    %9 = arith.truncf %8 : vector<256x128xf32> to vector<256x128xbf16>
    %c0_2 = arith.constant 0 : index
    %c0_3 = arith.constant 0 : index
    %10 = vector.load %arg2[%c0_2, %c0_3] : memref<256x128xbf16, #tpu.memory_space<vmem>>, vector<256x128xbf16>
    tpu.vector_store %arg2[%c0_2, %c0_3], %9 {strides = array<i32>} : memref<256x128xbf16, #tpu.memory_space<vmem>>, vector<256x128xbf16>,
    %cst_4 = arith.constant 1.000000e+00 : f32
    %11 = vector.broadcast %cst_4 : f32 to vector<8x128xf32>
    %cst_5 = arith.constant dense<0.000000e+00> : vector<8x256xf32>
    %12 = tpu.matmul %11, %1, %cst_5 {dimension_numbers = #tpu.dot_dimension_numbers<[1], [1], [0], [0], [0, 0, 1, 0], [], []>} : vector<8x128xf32>, vector<256x128xf32>, vector<8x256xf32> -> vector<8x256xf32>
    %13 = vector.extract_strided_slice %12 {offsets = [0, 0], sizes = [1, 256], strides = [1, 1]} : vector<8x256xf32> to vector<1x256xf32>
    %cst_6 = arith.constant 9.99999993E-9 : f32
    %14 = vector.broadcast %cst_6 : f32 to vector<1x256xf32>
    %15 = arith.maximumf %13, %14 : vector<1x256xf32>
    %16 = math.rsqrt %15 : vector<1x256xf32>
    %c0_7 = arith.constant 0 : index
    %c0_8 = arith.constant 0 : index
    %17 = vector.load %arg3[%c0_7, %c0_8] : memref<1x256xf32, #tpu.memory_space<vmem>>, vector<1x256xf32>
    tpu.vector_store %arg3[%c0_7, %c0_8], %16 {strides = array<i32>} : memref<1x256xf32, #tpu.memory_space<vmem>>, vector<1x256xf32>,
    return
  }
  func.func @transform_0(%arg0: i32) -> (i32, i32) {
    %c0_i32 = arith.constant 0 : i32
    %c0_i32_0 = arith.constant 0 : i32
    return %arg0, %c0_i32 : i32, i32
  }
  func.func @transform_1(%arg0: i32) -> (i32, i32) {
    %c0_i32 = arith.constant 0 : i32
    %c0_i32_0 = arith.constant 0 : i32
    return %arg0, %c0_i32 : i32, i32
  }
  func.func @transform_2(%arg0: i32) -> (i32, i32) {
    %c0_i32 = arith.constant 0 : i32
    %c0_i32_0 = arith.constant 0 : i32
    return %c0_i32, %arg0 : i32, i32
  }
}

module attributes {stable_mosaic.version = 11 : i64} {
  func.func @_lm_kernel(%arg0: i32, %arg1: i32, %arg2: memref<32x128xf32, #tpu.memory_space<vmem>>, %arg3: memref<256x128xf32, #tpu.memory_space<vmem>>, %arg4: memref<1x256xf32, #tpu.memory_space<vmem>>, %arg5: memref<32x1xi32, #tpu.memory_space<vmem>>, %arg6: memref<32x256xf32, #tpu.memory_space<vmem>>, %arg7: memref<32x1xf32, #tpu.memory_space<vmem>>) attributes {dimension_semantics = [#tpu.dimension_semantics<parallel>, #tpu.dimension_semantics<arbitrary>], iteration_bounds = array<i64: 1, 1>, scalar_prefetch = 0 : i64, scratch_operands = 1 : i64, tpu.core_type = #tpu.core_type<tc>, window_params = [{transform_indices = @transform_0, window_bounds = array<i64: 32, 128>}, {transform_indices = @transform_1, window_bounds = array<i64: 256, 128>}, {transform_indices = @transform_2, window_bounds = array<i64: 1, 256>}, {transform_indices = @transform_3, window_bounds = array<i64: 32, 1>}, {transform_indices = @transform_4, window_bounds = array<i64: 32, 256>}]} {
    %c0_i32 = arith.constant 0 : i32
    %0 = arith.cmpi eq, %arg1, %c0_i32 : i32
    %1 = arith.extui %0 : i1 to i32
    %c0_i32_0 = arith.constant 0 : i32
    %2 = arith.cmpi ne, %1, %c0_i32_0 : i32
    scf.if %2 {
      %c0_13 = arith.constant 0 : index
      %c0_14 = arith.constant 0 : index
      %23 = vector.load %arg2[%c0_13, %c0_14] : memref<32x128xf32, #tpu.memory_space<vmem>>, vector<32x128xf32>
      %24 = arith.mulf %23, %23 : vector<32x128xf32>
      %cst_15 = arith.constant dense<0.000000e+00> : vector<32xf32>
      %25 = vector.multi_reduction <add>, %24, %cst_15 [1] : vector<32x128xf32> to vector<32xf32>
      %26 = vector.shape_cast %25 : vector<32xf32> to vector<32x1xf32>
      %cst_16 = arith.constant 9.99999993E-9 : f32
      %27 = vector.broadcast %cst_16 : f32 to vector<32x1xf32>
      %28 = arith.maximumf %26, %27 : vector<32x1xf32>
      %29 = math.rsqrt %28 : vector<32x1xf32>
      %cst_17 = arith.constant 3.000000e+01 : f32
      %30 = vector.broadcast %cst_17 : f32 to vector<32x1xf32>
      %31 = arith.mulf %30, %29 : vector<32x1xf32>
      %c0_18 = arith.constant 0 : index
      %c0_19 = arith.constant 0 : index
      %32 = vector.load %arg7[%c0_18, %c0_19] : memref<32x1xf32, #tpu.memory_space<vmem>>, vector<32x1xf32>
      tpu.vector_store %arg7[%c0_18, %c0_19], %31 {strides = array<i32>} : memref<32x1xf32, #tpu.memory_space<vmem>>, vector<32x1xf32>,
    } else {
    }
    %c0 = arith.constant 0 : index
    %c0_1 = arith.constant 0 : index
    %3 = vector.load %arg2[%c0, %c0_1] : memref<32x128xf32, #tpu.memory_space<vmem>>, vector<32x128xf32>
    %c0_2 = arith.constant 0 : index
    %c0_3 = arith.constant 0 : index
    %4 = vector.load %arg3[%c0_2, %c0_3] : memref<256x128xf32, #tpu.memory_space<vmem>>, vector<256x128xf32>
    %cst = arith.constant dense<0.000000e+00> : vector<32x256xf32>
    %5 = tpu.matmul %3, %4, %cst {dimension_numbers = #tpu.dot_dimension_numbers<[1], [1], [0], [0], [0, 0, 1, 0], [], []>} : vector<32x128xf32>, vector<256x128xf32>, vector<32x256xf32> -> vector<32x256xf32>
    %c0_4 = arith.constant 0 : index
    %c0_5 = arith.constant 0 : index
    %6 = vector.load %arg7[%c0_4, %c0_5] : memref<32x1xf32, #tpu.memory_space<vmem>>, vector<32x1xf32>
    %7 = vector.broadcast %6 : vector<32x1xf32> to vector<32x256xf32>
    %8 = arith.mulf %5, %7 : vector<32x256xf32>
    %c0_6 = arith.constant 0 : index
    %c0_7 = arith.constant 0 : index
    %9 = vector.load %arg4[%c0_6, %c0_7] : memref<1x256xf32, #tpu.memory_space<vmem>>, vector<1x256xf32>
    %10 = vector.broadcast %9 : vector<1x256xf32> to vector<32x256xf32>
    %11 = arith.mulf %8, %10 : vector<32x256xf32>
    %c256_i32 = arith.constant 256 : i32
    %12 = arith.muli %c256_i32, %arg1 : i32
    %13 = tpu.iota {dimensions = array<i32: 1>} : vector<32x256xi32>
    %14 = vector.broadcast %12 : i32 to vector<32x256xi32>
    %15 = arith.addi %14, %13 : vector<32x256xi32>
    %c0_8 = arith.constant 0 : index
    %c0_9 = arith.constant 0 : index
    %16 = vector.load %arg5[%c0_8, %c0_9] : memref<32x1xi32, #tpu.memory_space<vmem>>, vector<32x1xi32>
    %17 = vector.broadcast %16 : vector<32x1xi32> to vector<32x256xi32>
    %18 = arith.cmpi eq, %15, %17 : vector<32x256xi32>
    %cst_10 = arith.constant 1.200000e+01 : f32
    %19 = vector.broadcast %cst_10 : f32 to vector<32x256xf32>
    %20 = arith.subf %11, %19 : vector<32x256xf32>
    %21 = arith.select %18, %20, %11 : vector<32x256xi1>, vector<32x256xf32>
    %c0_11 = arith.constant 0 : index
    %c0_12 = arith.constant 0 : index
    %22 = vector.load %arg6[%c0_11, %c0_12] : memref<32x256xf32, #tpu.memory_space<vmem>>, vector<32x256xf32>
    tpu.vector_store %arg6[%c0_11, %c0_12], %21 {strides = array<i32>} : memref<32x256xf32, #tpu.memory_space<vmem>>, vector<32x256xf32>,
    return
  }
  func.func @transform_0(%arg0: i32, %arg1: i32) -> (i32, i32) {
    %c0_i32 = arith.constant 0 : i32
    %c0_i32_0 = arith.constant 0 : i32
    return %arg0, %c0_i32 : i32, i32
  }
  func.func @transform_1(%arg0: i32, %arg1: i32) -> (i32, i32) {
    %c0_i32 = arith.constant 0 : i32
    %c0_i32_0 = arith.constant 0 : i32
    return %arg1, %c0_i32 : i32, i32
  }
  func.func @transform_2(%arg0: i32, %arg1: i32) -> (i32, i32) {
    %c0_i32 = arith.constant 0 : i32
    %c0_i32_0 = arith.constant 0 : i32
    return %c0_i32, %arg1 : i32, i32
  }
  func.func @transform_3(%arg0: i32, %arg1: i32) -> (i32, i32) {
    %c0_i32 = arith.constant 0 : i32
    %c0_i32_0 = arith.constant 0 : i32
    return %arg0, %c0_i32 : i32, i32
  }
  func.func @transform_4(%arg0: i32, %arg1: i32) -> (i32, i32) {
    %c0_i32 = arith.constant 0 : i32
    return %arg0, %arg1 : i32, i32
  }
}

</mosaic_0001>

<llo_original>
// kernel: lm_regular_product.3
$region0: #{lm_regular_product.3}
  #allocation0 [shape = 'u32[]', space=smem, size = 0x4, offset = 0x4, fixed_abs, tag = 'smem constant byte address 0x4 - core index']
  #allocation1 [shape = 'u32[144,128]{1,0:T(1,128)}', space=vmem, size = 0x12000, scoped, tag = 'internal scratch']
  %s0 = inlined_call_operand.hbm [shape: f32[256,128], index: 0, kind: input, shape index: {}]
  %s1 = inlined_call_operand.hbm [shape: bf16[256,128], index: 1, kind: output, shape index: {0}]
  %s2 = inlined_call_operand.hbm [shape: f32[1,256], index: 2, kind: output, shape index: {1}]
  %3 = xla_tuple %s1, %s2
  %s4 = sld [smem:[#allocation0]]
  $region26: #{lm_regular_product.3} parent=0
    _
  %s6 = ssub.s32 1, %s4
  %s7 = scalar_select 0, %s6, %s4
  $region1: #{lm_regular_product.3} parent=0
    #allocation2 [shape = 'u8[131072]{0}', space=vmem, size = 0x20000, scoped, tag = 'input window, operand 0, single buffered']
    #allocation3 [shape = 's32[1]{0}', space=sflag, size = 0x4, scoped, tag = 'scoped memory for lm_regular_product.3']
    #allocation4 [shape = 's32[1]{0}', space=sflag, size = 0x4, scoped, tag = 'scoped memory for lm_regular_product.3']
    #allocation5 [shape = 'u8[65536]{0}', space=vmem, size = 0x10000, scoped, tag = 'output window, operand 0, single buffered']
    #allocation6 [shape = 'u8[1024]{0}', space=vmem, size = 0x400, scoped, tag = 'output window, operand 1, single buffered']
    #allocation7 [shape = 's32[1]{0}', space=sflag, size = 0x4, scoped, tag = 'scoped memory for lm_regular_product.3']
    %8 = vsyncpa [#allocation3], 0
    %9 = vsyncpa [#allocation4], 0
    %10 = vsyncpa [#allocation7], 0
    // Predicated region
    $region2: #{lm_regular_product.3} parent=1 // pred_check
      _
    $region3: #{lm_regular_product.3} parent=1 // pred_check_branch
      %12 = sbr.rel (0) target = $region5
    $region4: #{lm_regular_product.3} parent=1 // pred_region
      %s14 = ssub.s32 4096, 4096
      %15 = vsyncadd [#allocation3], %s14
      %s16 = sshll.u32 [#allocation2], 4
      %s17 = int_to_ptr.vmem [resolvable:$true] %s16
      %22 = dma.hbm_to_vmem [thread:$0]  %s0, 4096, %s17, [#allocation3], 128, 128, 8
    $region5: #{lm_regular_product.3} parent=1 // pred_fallthru
      _
    // Predicated region
    $region6: #{lm_regular_product.3} parent=1 // pred_check
      _
    $region7: #{lm_regular_product.3} parent=1 // pred_check_branch
      %24 = sbr.rel (0) target = $region9
    $region8: #{lm_regular_product.3} parent=1 // pred_region
      %25 = dma.done [#allocation3], 4096
    $region9: #{lm_regular_product.3} parent=1 // pred_fallthru
      _
    %v26 = vld [vmem:[#allocation2] sm:$0xff]
    %v27 = vld [vmem:[#allocation2 + $0x8] sm:$0xff]
    %v28 = vld [vmem:[#allocation2 + $0x10] sm:$0xff]
    %v29 = vld [vmem:[#allocation2 + $0x18] sm:$0xff]
    %v30 = vld [vmem:[#allocation2 + $0x20] sm:$0xff]
    %v31 = vld [vmem:[#allocation2 + $0x28] sm:$0xff]
    %v32 = vld [vmem:[#allocation2 + $0x30] sm:$0xff]
    %v33 = vld [vmem:[#allocation2 + $0x38] sm:$0xff]
    %v34 = vld [vmem:[#allocation2 + $0x40] sm:$0xff]
    %v35 = vld [vmem:[#allocation2 + $0x48] sm:$0xff]
    %v36 = vld [vmem:[#allocation2 + $0x50] sm:$0xff]
    %v37 = vld [vmem:[#allocation2 + $0x58] sm:$0xff]
    %v38 = vld [vmem:[#allocation2 + $0x60] sm:$0xff]
    %v39 = vld [vmem:[#allocation2 + $0x68] sm:$0xff]
    %v40 = vld [vmem:[#allocation2 + $0x70] sm:$0xff]
    %v41 = vld [vmem:[#allocation2 + $0x78] sm:$0xff]
    %v42 = vld [vmem:[#allocation2 + $0x80] sm:$0xff]
    %v43 = vld [vmem:[#allocation2 + $0x88] sm:$0xff]
    %v44 = vld [vmem:[#allocation2 + $0x90] sm:$0xff]
    %v45 = vld [vmem:[#allocation2 + $0x98] sm:$0xff]
    %v46 = vld [vmem:[#allocation2 + $0xa0] sm:$0xff]
    %v47 = vld [vmem:[#allocation2 + $0xa8] sm:$0xff]
    %v48 = vld [vmem:[#allocation2 + $0xb0] sm:$0xff]
    %v49 = vld [vmem:[#allocation2 + $0xb8] sm:$0xff]
    %v50 = vld [vmem:[#allocation2 + $0xc0] sm:$0xff]
    %v51 = vld [vmem:[#allocation2 + $0xc8] sm:$0xff]
    %v52 = vld [vmem:[#allocation2 + $0xd0] sm:$0xff]
    %v53 = vld [vmem:[#allocation2 + $0xd8] sm:$0xff]
    %v54 = vld [vmem:[#allocation2 + $0xe0] sm:$0xff]
    %v55 = vld [vmem:[#allocation2 + $0xe8] sm:$0xff]
    %v56 = vld [vmem:[#allocation2 + $0xf0] sm:$0xff]
    %v57 = vld [vmem:[#allocation2 + $0xf8] sm:$0xff]
    %v58 = vmul.f32 %v26, %v26
    %v59 = vmul.f32 %v27, %v27
    %v60 = vmul.f32 %v28, %v28
    %v61 = vmul.f32 %v29, %v29
    %v62 = vmul.f32 %v30, %v30
    %v63 = vmul.f32 %v31, %v31
    %v64 = vmul.f32 %v32, %v32
    %v65 = vmul.f32 %v33, %v33
    %v66 = vmul.f32 %v34, %v34
    %v67 = vmul.f32 %v35, %v35
    %v68 = vmul.f32 %v36, %v36
    %v69 = vmul.f32 %v37, %v37
    %v70 = vmul.f32 %v38, %v38
    %v71 = vmul.f32 %v39, %v39
    %v72 = vmul.f32 %v40, %v40
    %v73 = vmul.f32 %v41, %v41
    %v74 = vmul.f32 %v42, %v42
    %v75 = vmul.f32 %v43, %v43
    %v76 = vmul.f32 %v44, %v44
    %v77 = vmul.f32 %v45, %v45
    %v78 = vmul.f32 %v46, %v46
    %v79 = vmul.f32 %v47, %v47
    %v80 = vmul.f32 %v48, %v48
    %v81 = vmul.f32 %v49, %v49
    %v82 = vmul.f32 %v50, %v50
    %v83 = vmul.f32 %v51, %v51
    %v84 = vmul.f32 %v52, %v52
    %v85 = vmul.f32 %v53, %v53
    %v86 = vmul.f32 %v54, %v54
    %v87 = vmul.f32 %v55, %v55
    %v88 = vmul.f32 %v56, %v56
    %v89 = vmul.f32 %v57, %v57
    %90 = vadd.xlane.f32.xlu0 %v58
    %v91 = vpop.xlane.xlu0 %90
    %92 = vadd.xlane.f32.xlu0 %v59
    %v93 = vpop.xlane.xlu0 %92
    %94 = vadd.xlane.f32.xlu0 %v60
    %v95 = vpop.xlane.xlu0 %94
    %96 = vadd.xlane.f32.xlu0 %v61
    %v97 = vpop.xlane.xlu0 %96
    %98 = vadd.xlane.f32.xlu0 %v62
    %v99 = vpop.xlane.xlu0 %98
    %100 = vadd.xlane.f32.xlu0 %v63
    %v101 = vpop.xlane.xlu0 %100
    %102 = vadd.xlane.f32.xlu0 %v64
    %v103 = vpop.xlane.xlu0 %102
    %104 = vadd.xlane.f32.xlu0 %v65
    %v105 = vpop.xlane.xlu0 %104
    %106 = vadd.xlane.f32.xlu0 %v66
    %v107 = vpop.xlane.xlu0 %106
    %108 = vadd.xlane.f32.xlu0 %v67
    %v109 = vpop.xlane.xlu0 %108
    %110 = vadd.xlane.f32.xlu0 %v68
    %v111 = vpop.xlane.xlu0 %110
    %112 = vadd.xlane.f32.xlu0 %v69
    %v113 = vpop.xlane.xlu0 %112
    %114 = vadd.xlane.f32.xlu0 %v70
    %v115 = vpop.xlane.xlu0 %114
    %116 = vadd.xlane.f32.xlu0 %v71
    %v117 = vpop.xlane.xlu0 %116
    %118 = vadd.xlane.f32.xlu0 %v72
    %v119 = vpop.xlane.xlu0 %118
    %120 = vadd.xlane.f32.xlu0 %v73
    %v121 = vpop.xlane.xlu0 %120
    %122 = vadd.xlane.f32.xlu0 %v74
    %v123 = vpop.xlane.xlu0 %122
    %124 = vadd.xlane.f32.xlu0 %v75
    %v125 = vpop.xlane.xlu0 %124
    %126 = vadd.xlane.f32.xlu0 %v76
    %v127 = vpop.xlane.xlu0 %126
    %128 = vadd.xlane.f32.xlu0 %v77
    %v129 = vpop.xlane.xlu0 %128
    %130 = vadd.xlane.f32.xlu0 %v78
    %v131 = vpop.xlane.xlu0 %130
    %132 = vadd.xlane.f32.xlu0 %v79
    %v133 = vpop.xlane.xlu0 %132
    %134 = vadd.xlane.f32.xlu0 %v80
    %v135 = vpop.xlane.xlu0 %134
    %136 = vadd.xlane.f32.xlu0 %v81
    %v137 = vpop.xlane.xlu0 %136
    %138 = vadd.xlane.f32.xlu0 %v82
    %v139 = vpop.xlane.xlu0 %138
    %140 = vadd.xlane.f32.xlu0 %v83
    %v141 = vpop.xlane.xlu0 %140
    %142 = vadd.xlane.f32.xlu0 %v84
    %v143 = vpop.xlane.xlu0 %142
    %144 = vadd.xlane.f32.xlu0 %v85
    %v145 = vpop.xlane.xlu0 %144
    %146 = vadd.xlane.f32.xlu0 %v86
    %v147 = vpop.xlane.xlu0 %146
    %148 = vadd.xlane.f32.xlu0 %v87
    %v149 = vpop.xlane.xlu0 %148
    %150 = vadd.xlane.f32.xlu0 %v88
    %v151 = vpop.xlane.xlu0 %150
    %152 = vadd.xlane.f32.xlu0 %v89
    %v153 = vpop.xlane.xlu0 %152
    %v154 = vmax.f32 %v91, 1e-24
    %v155 = vmax.f32 %v93, 1e-24
    %v156 = vmax.f32 %v95, 1e-24
    %v157 = vmax.f32 %v97, 1e-24
    %v158 = vmax.f32 %v99, 1e-24
    %v159 = vmax.f32 %v101, 1e-24
    %v160 = vmax.f32 %v103, 1e-24
    %v161 = vmax.f32 %v105, 1e-24
    %v162 = vmax.f32 %v107, 1e-24
    %v163 = vmax.f32 %v109, 1e-24
    %v164 = vmax.f32 %v111, 1e-24
    %v165 = vmax.f32 %v113, 1e-24
    %v166 = vmax.f32 %v115, 1e-24
    %v167 = vmax.f32 %v117, 1e-24
    %v168 = vmax.f32 %v119, 1e-24
    %v169 = vmax.f32 %v121, 1e-24
    %v170 = vmax.f32 %v123, 1e-24
    %v171 = vmax.f32 %v125, 1e-24
    %v172 = vmax.f32 %v127, 1e-24
    %v173 = vmax.f32 %v129, 1e-24
    %v174 = vmax.f32 %v131, 1e-24
    %v175 = vmax.f32 %v133, 1e-24
    %v176 = vmax.f32 %v135, 1e-24
    %v177 = vmax.f32 %v137, 1e-24
    %v178 = vmax.f32 %v139, 1e-24
    %v179 = vmax.f32 %v141, 1e-24
    %v180 = vmax.f32 %v143, 1e-24
    %v181 = vmax.f32 %v145, 1e-24
    %v182 = vmax.f32 %v147, 1e-24
    %v183 = vmax.f32 %v149, 1e-24
    %v184 = vmax.f32 %v151, 1e-24
    %v185 = vmax.f32 %v153, 1e-24
    %v186 = vrsqrt.pop %v154
    %v187 = vrsqrt.pop %v155
    %v188 = vrsqrt.pop %v156
    %v189 = vrsqrt.pop %v157
    %v190 = vrsqrt.pop %v158
    %v191 = vrsqrt.pop %v159
    %v192 = vrsqrt.pop %v160
    %v193 = vrsqrt.pop %v161
    %v194 = vrsqrt.pop %v162
    %v195 = vrsqrt.pop %v163
    %v196 = vrsqrt.pop %v164
    %v197 = vrsqrt.pop %v165
    %v198 = vrsqrt.pop %v166
    %v199 = vrsqrt.pop %v167
    %v200 = vrsqrt.pop %v168
    %v201 = vrsqrt.pop %v169
    %v202 = vrsqrt.pop %v170
    %v203 = vrsqrt.pop %v171
    %v204 = vrsqrt.pop %v172
    %v205 = vrsqrt.pop %v173
    %v206 = vrsqrt.pop %v174
    %v207 = vrsqrt.pop %v175
    %v208 = vrsqrt.pop %v176
    %v209 = vrsqrt.pop %v177
    %v210 = vrsqrt.pop %v178
    %v211 = vrsqrt.pop %v179
    %v212 = vrsqrt.pop %v180
    %v213 = vrsqrt.pop %v181
    %v214 = vrsqrt.pop %v182
    %v215 = vrsqrt.pop %v183
    %v216 = vrsqrt.pop %v184
    %v217 = vrsqrt.pop %v185
    %v218 = vmul.f32 %v26, %v186
    %v219 = vmul.f32 %v27, %v187
    %v220 = vmul.f32 %v28, %v188
    %v221 = vmul.f32 %v29, %v189
    %v222 = vmul.f32 %v30, %v190
    %v223 = vmul.f32 %v31, %v191
    %v224 = vmul.f32 %v32, %v192
    %v225 = vmul.f32 %v33, %v193
    %v226 = vmul.f32 %v34, %v194
    %v227 = vmul.f32 %v35, %v195
    %v228 = vmul.f32 %v36, %v196
    %v229 = vmul.f32 %v37, %v197
    %v230 = vmul.f32 %v38, %v198
    %v231 = vmul.f32 %v39, %v199
    %v232 = vmul.f32 %v40, %v200
    %v233 = vmul.f32 %v41, %v201
    %v234 = vmul.f32 %v42, %v202
    %v235 = vmul.f32 %v43, %v203
    %v236 = vmul.f32 %v44, %v204
    %v237 = vmul.f32 %v45, %v205
    %v238 = vmul.f32 %v46, %v206
    %v239 = vmul.f32 %v47, %v207
    %v240 = vmul.f32 %v48, %v208
    %v241 = vmul.f32 %v49, %v209
    %v242 = vmul.f32 %v50, %v210
    %v243 = vmul.f32 %v51, %v211
    %v244 = vmul.f32 %v52, %v212
    %v245 = vmul.f32 %v53, %v213
    %v246 = vmul.f32 %v54, %v214
    %v247 = vmul.f32 %v55, %v215
    %v248 = vmul.f32 %v56, %v216
    %v249 = vmul.f32 %v57, %v217
    %v250 = vpack.c.bf16 %v219, %v218
    %v251 = vpack.c.bf16 %v221, %v220
    %v252 = vpack.c.bf16 %v223, %v222
    %v253 = vpack.c.bf16 %v225, %v224
    %v254 = vpack.c.bf16 %v227, %v226
    %v255 = vpack.c.bf16 %v229, %v228
    %v256 = vpack.c.bf16 %v231, %v230
    %v257 = vpack.c.bf16 %v233, %v232
    %v258 = vpack.c.bf16 %v235, %v234
    %v259 = vpack.c.bf16 %v237, %v236
    %v260 = vpack.c.bf16 %v239, %v238
    %v261 = vpack.c.bf16 %v241, %v240
    %v262 = vpack.c.bf16 %v243, %v242
    %v263 = vpack.c.bf16 %v245, %v244
    %v264 = vpack.c.bf16 %v247, %v246
    %v265 = vpack.c.bf16 %v249, %v248
    %v282 = vunpack.c.l.b16 %v250
    %v283 = vunpack.c.h.b16 %v250
    %v284 = vunpack.c.l.b16 %v251
    %v285 = vunpack.c.h.b16 %v251
    %v286 = vunpack.c.l.b16 %v252
    %v287 = vunpack.c.h.b16 %v252
    %v288 = vunpack.c.l.b16 %v253
    %v289 = vunpack.c.h.b16 %v253
    %v290 = vunpack.c.l.b16 %v254
    %v291 = vunpack.c.h.b16 %v254
    %v292 = vunpack.c.l.b16 %v255
    %v293 = vunpack.c.h.b16 %v255
    %v294 = vunpack.c.l.b16 %v256
    %v295 = vunpack.c.h.b16 %v256
    %v296 = vunpack.c.l.b16 %v257
    %v297 = vunpack.c.h.b16 %v257
    %v298 = vunpack.c.l.b16 %v258
    %v299 = vunpack.c.h.b16 %v258
    %v300 = vunpack.c.l.b16 %v259
    %v301 = vunpack.c.h.b16 %v259
    %v302 = vunpack.c.l.b16 %v260
    %v303 = vunpack.c.h.b16 %v260
    %v304 = vunpack.c.l.b16 %v261
    %v305 = vunpack.c.h.b16 %v261
    %v306 = vunpack.c.l.b16 %v262
    %v307 = vunpack.c.h.b16 %v262
    %v308 = vunpack.c.l.b16 %v263
    %v309 = vunpack.c.h.b16 %v263
    %v310 = vunpack.c.l.b16 %v264
    %v311 = vunpack.c.h.b16 %v264
    %v312 = vunpack.c.l.b16 %v265
    %v313 = vunpack.c.h.b16 %v265
    %v314 = vpack.c.b16 %v282, %v282
    %v315 = vpack.c.b16 %v283, %v283
    %v316 = vpack.c.b16 %v284, %v284
    %v317 = vpack.c.b16 %v285, %v285
    %v318 = vpack.c.b16 %v286, %v286
    %v319 = vpack.c.b16 %v287, %v287
    %v320 = vpack.c.b16 %v288, %v288
    %v321 = vpack.c.b16 %v289, %v289
    %v322 = vpack.c.b16 %v290, %v290
    %v323 = vpack.c.b16 %v291, %v291
    %v324 = vpack.c.b16 %v292, %v292
    %v325 = vpack.c.b16 %v293, %v293
    %v326 = vpack.c.b16 %v294, %v294
    %v327 = vpack.c.b16 %v295, %v295
    %v328 = vpack.c.b16 %v296, %v296
    %v329 = vpack.c.b16 %v297, %v297
    %v330 = vpack.c.b16 %v298, %v298
    %v331 = vpack.c.b16 %v299, %v299
    %v332 = vpack.c.b16 %v300, %v300
    %v333 = vpack.c.b16 %v301, %v301
    %v334 = vpack.c.b16 %v302, %v302
    %v335 = vpack.c.b16 %v303, %v303
    %v336 = vpack.c.b16 %v304, %v304
    %v337 = vpack.c.b16 %v305, %v305
    %v338 = vpack.c.b16 %v306, %v306
    %v339 = vpack.c.b16 %v307, %v307
    %v340 = vpack.c.b16 %v308, %v308
    %v341 = vpack.c.b16 %v309, %v309
    %v342 = vpack.c.b16 %v310, %v310
    %v343 = vpack.c.b16 %v311, %v311
    %v344 = vpack.c.b16 %v312, %v312
    %v345 = vpack.c.b16 %v313, %v313
    %378 = vst [vmem:[#allocation5] sm:$0xf] %v314
    %379 = vst [vmem:[#allocation5 + $0x4] sm:$0xf] %v315
    %380 = vst [vmem:[#allocation5 + $0x8] sm:$0xf] %v316
    %381 = vst [vmem:[#allocation5 + $0xc] sm:$0xf] %v317
    %382 = vst [vmem:[#allocation5 + $0x10] sm:$0xf] %v318
    %383 = vst [vmem:[#allocation5 + $0x14] sm:$0xf] %v319
    %384 = vst [vmem:[#allocation5 + $0x18] sm:$0xf] %v320
    %385 = vst [vmem:[#allocation5 + $0x1c] sm:$0xf] %v321
    %386 = vst [vmem:[#allocation5 + $0x20] sm:$0xf] %v322
    %387 = vst [vmem:[#allocation5 + $0x24] sm:$0xf] %v323
    %388 = vst [vmem:[#allocation5 + $0x28] sm:$0xf] %v324
    %389 = vst [vmem:[#allocation5 + $0x2c] sm:$0xf] %v325
    %390 = vst [vmem:[#allocation5 + $0x30] sm:$0xf] %v326
    %391 = vst [vmem:[#allocation5 + $0x34] sm:$0xf] %v327
    %392 = vst [vmem:[#allocation5 + $0x38] sm:$0xf] %v328
    %393 = vst [vmem:[#allocation5 + $0x3c] sm:$0xf] %v329
    %394 = vst [vmem:[#allocation5 + $0x40] sm:$0xf] %v330
    %395 = vst [vmem:[#allocation5 + $0x44] sm:$0xf] %v331
    %396 = vst [vmem:[#allocation5 + $0x48] sm:$0xf] %v332
    %397 = vst [vmem:[#allocation5 + $0x4c] sm:$0xf] %v333
    %398 = vst [vmem:[#allocation5 + $0x50] sm:$0xf] %v334
    %399 = vst [vmem:[#allocation5 + $0x54] sm:$0xf] %v335
    %400 = vst [vmem:[#allocation5 + $0x58] sm:$0xf] %v336
    %401 = vst [vmem:[#allocation5 + $0x5c] sm:$0xf] %v337
    %402 = vst [vmem:[#allocation5 + $0x60] sm:$0xf] %v338
    %403 = vst [vmem:[#allocation5 + $0x64] sm:$0xf] %v339
    %404 = vst [vmem:[#allocation5 + $0x68] sm:$0xf] %v340
    %405 = vst [vmem:[#allocation5 + $0x6c] sm:$0xf] %v341
    %406 = vst [vmem:[#allocation5 + $0x70] sm:$0xf] %v342
    %407 = vst [vmem:[#allocation5 + $0x74] sm:$0xf] %v343
    %408 = vst [vmem:[#allocation5 + $0x78] sm:$0xf] %v344
    %409 = vst [vmem:[#allocation5 + $0x7c] sm:$0xf] %v345
    %410 = vmatprep.subr.mxu0 0.0
    %411 = vmatpush1.xpose.msra.mxu0 %v58
    %412 = vmatprep.subr.mxu0 0.0
    %413 = vmatpush1.xpose.msra.mxu0 %v59
    %414 = vmatprep.subr.mxu0 0.0
    %415 = vmatpush1.xpose.msra.mxu0 %v60
    %416 = vmatprep.subr.mxu0 0.0
    %417 = vmatpush1.xpose.msra.mxu0 %v61
    %418 = vmatprep.subr.mxu0 0.0
    %419 = vmatpush1.xpose.msra.mxu0 %v62
    %420 = vmatprep.subr.mxu0 0.0
    %421 = vmatpush1.xpose.msra.mxu0 %v63
    %422 = vmatprep.subr.mxu0 0.0
    %423 = vmatpush1.xpose.msra.mxu0 %v64
    %424 = vmatprep.subr.mxu0 0.0
    %425 = vmatpush1.xpose.msra.mxu0 %v65
    %426 = vmatprep.subr.mxu0 0.0
    %427 = vmatpush1.xpose.msra.mxu0 %v66
    %428 = vmatprep.subr.mxu0 0.0
    %429 = vmatpush1.xpose.msra.mxu0 %v67
    %430 = vmatprep.subr.mxu0 0.0
    %431 = vmatpush1.xpose.msra.mxu0 %v68
    %432 = vmatprep.subr.mxu0 0.0
    %433 = vmatpush1.xpose.msra.mxu0 %v69
    %434 = vmatprep.subr.mxu0 0.0
    %435 = vmatpush1.xpose.msra.mxu0 %v70
    %436 = vmatprep.subr.mxu0 0.0
    %437 = vmatpush1.xpose.msra.mxu0 %v71
    %438 = vmatprep.subr.mxu0 0.0
    %439 = vmatpush1.xpose.msra.mxu0 %v72
    %440 = vmatprep.subr.mxu0 0.0
    %441 = vmatpush1.xpose.msra.mxu0 %v73
    %442 = vmatprep.subr.mxu0 0.0
    %443 = vmatpush1.xpose.msra.mxu0 %v74
    %444 = vmatprep.subr.mxu0 0.0
    %445 = vmatpush1.xpose.msra.mxu0 %v75
    %446 = vmatprep.subr.mxu0 0.0
    %447 = vmatpush1.xpose.msra.mxu0 %v76
    %448 = vmatprep.subr.mxu0 0.0
    %449 = vmatpush1.xpose.msra.mxu0 %v77
    %450 = vmatprep.subr.mxu0 0.0
    %451 = vmatpush1.xpose.msra.mxu0 %v78
    %452 = vmatprep.subr.mxu0 0.0
    %453 = vmatpush1.xpose.msra.mxu0 %v79
    %454 = vmatprep.subr.mxu0 0.0
    %455 = vmatpush1.xpose.msra.mxu0 %v80
    %456 = vmatprep.subr.mxu0 0.0
    %457 = vmatpush1.xpose.msra.mxu0 %v81
    %458 = vmatprep.subr.mxu0 0.0
    %459 = vmatpush1.xpose.msra.mxu0 %v82
    %460 = vmatprep.subr.mxu0 0.0
    %461 = vmatpush1.xpose.msra.mxu0 %v83
    %462 = vmatprep.subr.mxu0 0.0
    %463 = vmatpush1.xpose.msra.mxu0 %v84
    %464 = vmatprep.subr.mxu0 0.0
    %465 = vmatpush1.xpose.msra.mxu0 %v85
    %466 = vmatprep.subr.mxu0 0.0
    %467 = vmatpush1.xpose.msra.mxu0 %v86
    %468 = vmatprep.subr.mxu0 0.0
    %469 = vmatpush1.xpose.msra.mxu0 %v87
    %470 = vmatprep.subr.mxu0 0.0
    %471 = vmatpush1.xpose.msra.mxu0 %v88
    %472 = vmatprep.subr.mxu0 0.0
    %473 = vmatpush1.xpose.msra.mxu0 %v89
    %474 = vmatprep.mubr.f32.mxu0 0.0
    %475 = vmatmul.mubr.f32.gmra.mrb[0].mxu0 1.0
    %v476 = vpop.f32.mrb[0].mxu0
    %v477 = vadd.f32 0.0, %v476
    %v478 = vpop.f32.mrb[0].mxu0
    %v479 = vadd.f32 0.0, %v478
    %480 = vdwg.mxu0
    %v481 = vmax.f32 %v477, 1e-08
    %v482 = vmax.f32 %v479, 1e-08
    %v483 = vrsqrt.pop %v481
    %v484 = vrsqrt.pop %v482
    %v487 = vcombine.low %v483, %v484
    %v489 = vunpack.c.l.s4 1966171168
    %v490 = vunpack.c.0.s8 %v489
    %v491 = vlaneseq
    %v492 = vshrl.u32 %v491, 7
    %v493 = vsub.s32 %v490, %v492
    %v494 = vrot.slane %v487, %v493
    %v496 = vunpack.c.l.s4 1966171168
    %v497 = vunpack.c.0.s8 %v496
    %v498 = vlaneseq
    %v499 = vshrl.u32 %v498, 7
    %v500 = vsub.s32 %v497, %v499
    %v501 = vrot.slane %v494, %v500
    %v503 = vlaneseq
    %vm504 = vcmp.ge.s32.totalorder %v503, 0
    %vm505 = vcmp.lt.s32.totalorder %v503, 256
    %vm506 = vmand %vm504, %vm505
    %507 = vst.msk [vmem:[#allocation6] sm:$0x3] %vm506, %v501
    // Predicated region
    $region10: #{lm_regular_product.3} parent=1 // pred_check
      _
    $region11: #{lm_regular_product.3} parent=1 // pred_check_branch
      %509 = sbr.rel (0) target = $region13
    $region12: #{lm_regular_product.3} parent=1 // pred_region
      %s511 = ssub.s32 2048, 2048
      %512 = vsyncadd [#allocation4], %s511
      %s513 = sshll.u32 [#allocation5], 4
      %s514 = int_to_ptr.vmem [resolvable:$true] %s513
      %519 = dma.vmem_to_hbm [thread:$0]  %s514, 2048, %s1, [#allocation4], 64, 64, 4
    $region13: #{lm_regular_product.3} parent=1 // pred_fallthru
      _
    // Predicated region
    $region14: #{lm_regular_product.3} parent=1 // pred_check
      _
    $region15: #{lm_regular_product.3} parent=1 // pred_check_branch
      %521 = sbr.rel (0) target = $region17
    $region16: #{lm_regular_product.3} parent=1 // pred_region
      %s523 = ssub.s32 32, 32
      %524 = vsyncadd [#allocation7], %s523
      %s526 = sshll.u32 [#allocation6], 4
      %s527 = int_to_ptr.vmem [resolvable:$true] %s526
      %529 = dma.vmem_to_hbm [thread:$0]  %s527, 32, %s2, [#allocation7]
    $region17: #{lm_regular_product.3} parent=1 // pred_fallthru
      _
    // Predicated region
    $region18: #{lm_regular_product.3} parent=1 // pred_check
      _
    $region19: #{lm_regular_product.3} parent=1 // pred_check_branch
      %531 = sbr.rel (0) target = $region21
    $region20: #{lm_regular_product.3} parent=1 // pred_region
      %532 = dma.done [#allocation4], 2048
    $region21: #{lm_regular_product.3} parent=1 // pred_fallthru
      _
    // Predicated region
    $region22: #{lm_regular_product.3} parent=1 // pred_check
      _
    $region23: #{lm_regular_product.3} parent=1 // pred_check_branch
      %534 = sbr.rel (0) target = $region25
    $region24: #{lm_regular_product.3} parent=1 // pred_region
      %535 = dma.done [#allocation7], 32
    $region25: #{lm_regular_product.3} parent=1 // pred_fallthru
      _
    %536 = vsyncpa [#allocation3], 1
    %537 = vsyncpa [#allocation4], 1
    %538 = vsyncpa [#allocation7], 1

// kernel: lm_regular_product.4
$region0: #{lm_regular_product.4}
  #allocation0 [shape = 'u32[]', space=smem, size = 0x4, offset = 0x4, fixed_abs, tag = 'smem constant byte address 0x4 - core index']
  #allocation1 [shape = 'u32[144,128]{1,0:T(1,128)}', space=vmem, size = 0x12000, scoped, tag = 'internal scratch']
  #allocation2 [shape = 'f32[32,1]{1,0:T(8,128)}', space=vmem, size = 0x4000, scoped, tag = 'scratch operand']
  %s0 = inlined_call_operand.hbm [shape: f32[32,128], index: 0, kind: input, shape index: {}]
  %s1 = inlined_call_operand.hbm [shape: f32[256,128], index: 1, kind: input, shape index: {}]
  %s2 = inlined_call_operand.hbm [shape: f32[1,256], index: 2, kind: input, shape index: {}]
  %s3 = inlined_call_operand.hbm [shape: s32[32,1], index: 3, kind: input, shape index: {}]
  %s4 = inlined_call_operand.hbm [shape: f32[32,256], index: 4, kind: output, shape index: {}]
  %s5 = sld [smem:[#allocation0]]
  $region46: #{lm_regular_product.4} parent=0
    _
  %s7 = ssub.s32 1, %s5
  %s8 = scalar_select 0, %s7, %s5
  $region1: #{lm_regular_product.4} parent=0
    #allocation3 [shape = 'u8[16384]{0}', space=vmem, size = 0x4000, scoped, tag = 'input window, operand 0, single buffered']
    #allocation4 [shape = 's32[1]{0}', space=sflag, size = 0x4, scoped, tag = 'scoped memory for lm_regular_product.4']
    #allocation5 [shape = 's32[1]{0}', space=sflag, size = 0x4, scoped, tag = 'scoped memory for lm_regular_product.4']
    #allocation6 [shape = 'u8[131072]{0}', space=vmem, size = 0x20000, scoped, tag = 'input window, operand 1, single buffered']
    #allocation7 [shape = 's32[1]{0}', space=sflag, size = 0x4, scoped, tag = 'scoped memory for lm_regular_product.4']
    #allocation8 [shape = 'u8[1024]{0}', space=vmem, size = 0x400, scoped, tag = 'input window, operand 2, single buffered']
    #allocation9 [shape = 'u8[16384]{0}', space=vmem, size = 0x4000, scoped, tag = 'input window, operand 3, single buffered']
    #allocation10 [shape = 's32[1]{0}', space=sflag, size = 0x4, scoped, tag = 'scoped memory for lm_regular_product.4']
    #allocation11 [shape = 'u8[32768]{0}', space=vmem, size = 0x8000, scoped, tag = 'output window, operand 0, single buffered']
    %9 = vsyncpa [#allocation4], 0
    %10 = vsyncpa [#allocation7], 0
    %11 = vsyncpa [#allocation10], 0
    %12 = vsyncpa [#allocation5], 0
    // Predicated region
    $region2: #{lm_regular_product.4} parent=1 // pred_check
      _
    $region3: #{lm_regular_product.4} parent=1 // pred_check_branch
      %14 = sbr.rel (0) target = $region5
    $region4: #{lm_regular_product.4} parent=1 // pred_region
      %s16 = ssub.s32 512, 512
      %17 = vsyncadd [#allocation4], %s16
      %s18 = sshll.u32 [#allocation3], 4
      %s19 = int_to_ptr.vmem [resolvable:$true] %s18
      %24 = dma.hbm_to_vmem [thread:$0]  %s0, 512, %s19, [#allocation4], 128, 128, 8
    $region5: #{lm_regular_product.4} parent=1 // pred_fallthru
      _
    // Predicated region
    $region6: #{lm_regular_product.4} parent=1 // pred_check
      _
    $region7: #{lm_regular_product.4} parent=1 // pred_check_branch
      %26 = sbr.rel (0) target = $region9
    $region8: #{lm_regular_product.4} parent=1 // pred_region
      %s28 = ssub.s32 4096, 4096
      %29 = vsyncadd [#allocation7], %s28
      %s30 = sshll.u32 [#allocation6], 4
      %s31 = int_to_ptr.vmem [resolvable:$true] %s30
      %36 = dma.hbm_to_vmem [thread:$0]  %s1, 4096, %s31, [#allocation7], 128, 128, 8
    $region9: #{lm_regular_product.4} parent=1 // pred_fallthru
      _
    // Predicated region
    $region10: #{lm_regular_product.4} parent=1 // pred_check
      _
    $region11: #{lm_regular_product.4} parent=1 // pred_check_branch
      %38 = sbr.rel (0) target = $region13
    $region12: #{lm_regular_product.4} parent=1 // pred_region
      %s40 = ssub.s32 32, 32
      %41 = vsyncadd [#allocation7], %s40
      %s43 = sshll.u32 [#allocation8], 4
      %s44 = int_to_ptr.vmem [resolvable:$true] %s43
      %46 = dma.hbm_to_vmem [thread:$0]  %s2, 32, %s44, [#allocation7]
    $region13: #{lm_regular_product.4} parent=1 // pred_fallthru
      _
    // Predicated region
    $region14: #{lm_regular_product.4} parent=1 // pred_check
      _
    $region15: #{lm_regular_product.4} parent=1 // pred_check_branch
      %48 = sbr.rel (0) target = $region17
    $region16: #{lm_regular_product.4} parent=1 // pred_region
      %s50 = ssub.s32 512, 512
      %51 = vsyncadd [#allocation10], %s50
      %s52 = sshll.u32 [#allocation9], 4
      %s53 = int_to_ptr.vmem [resolvable:$true] %s52
      %58 = dma.hbm_to_vmem [thread:$0]  %s3, 512, %s53, [#allocation10], 128, 128, 8
    $region17: #{lm_regular_product.4} parent=1 // pred_fallthru
      _
    // Predicated region
    $region18: #{lm_regular_product.4} parent=1 // pred_check
      _
    $region19: #{lm_regular_product.4} parent=1 // pred_check_branch
      %60 = sbr.rel (0) target = $region21
    $region20: #{lm_regular_product.4} parent=1 // pred_region
      %61 = dma.done [#allocation4], 512
    $region21: #{lm_regular_product.4} parent=1 // pred_fallthru
      _
    // Predicated region
    $region22: #{lm_regular_product.4} parent=1 // pred_check
      _
    $region23: #{lm_regular_product.4} parent=1 // pred_check_branch
      %63 = sbr.rel (0) target = $region25
    $region24: #{lm_regular_product.4} parent=1 // pred_region
      %64 = dma.done [#allocation7], 4096
    $region25: #{lm_regular_product.4} parent=1 // pred_fallthru
      _
    // Predicated region
    $region26: #{lm_regular_product.4} parent=1 // pred_check
      _
    $region27: #{lm_regular_product.4} parent=1 // pred_check_branch
      %66 = sbr.rel (0) target = $region29
    $region28: #{lm_regular_product.4} parent=1 // pred_region
      %67 = dma.done [#allocation7], 32
    $region29: #{lm_regular_product.4} parent=1 // pred_fallthru
      _
    // Predicated region
    $region30: #{lm_regular_product.4} parent=1 // pred_check
      _
    $region31: #{lm_regular_product.4} parent=1 // pred_check_branch
      %69 = sbr.rel (0) target = $region33
    $region32: #{lm_regular_product.4} parent=1 // pred_region
      %70 = dma.done [#allocation10], 512
    $region33: #{lm_regular_product.4} parent=1 // pred_fallthru
      _
    %p71 = scmp.eq.s32.totalorder 0, 0
    // Predicated region
    $region34: #{lm_regular_product.4} parent=1 // pred_check
      %p72 = pneg %p71
    $region35: #{lm_regular_product.4} parent=1 // pred_check_branch
      %74 = sbr.rel (%p72) target = $region37
    $region36: #{lm_regular_product.4} parent=1 // pred_region
      %v75 = vld [vmem:[#allocation3] sm:$0xff]
      %v76 = vld [vmem:[#allocation3 + $0x8] sm:$0xff]
      %v77 = vld [vmem:[#allocation3 + $0x10] sm:$0xff]
      %v78 = vld [vmem:[#allocation3 + $0x18] sm:$0xff]
      %v79 = vmul.f32 %v75, %v75
      %v80 = vmul.f32 %v76, %v76
      %v81 = vmul.f32 %v77, %v77
      %v82 = vmul.f32 %v78, %v78
      %83 = vadd.xlane.f32.xlu0 %v79
      %v84 = vpop.xlane.xlu0 %83
      %85 = vadd.xlane.f32.xlu0 %v80
      %v86 = vpop.xlane.xlu0 %85
      %87 = vadd.xlane.f32.xlu0 %v81
      %v88 = vpop.xlane.xlu0 %87
      %89 = vadd.xlane.f32.xlu0 %v82
      %v90 = vpop.xlane.xlu0 %89
      %v91 = vmax.f32 %v84, 1e-08
      %v92 = vmax.f32 %v86, 1e-08
      %v93 = vmax.f32 %v88, 1e-08
      %v94 = vmax.f32 %v90, 1e-08
      %v95 = vrsqrt.pop %v91
      %v96 = vrsqrt.pop %v92
      %v97 = vrsqrt.pop %v93
      %v98 = vrsqrt.pop %v94
      %v99 = vmul.f32 %v95, 30.0
      %v100 = vmul.f32 %v96, 30.0
      %v101 = vmul.f32 %v97, 30.0
      %v102 = vmul.f32 %v98, 30.0
      %vm103 = vcmask 7168
      %104 = vst.msk [vmem:[#allocation2] sm:$0xff] %vm103, %v99
      %105 = vst.msk [vmem:[#allocation2 + $0x8] sm:$0xff] %vm103, %v100
      %106 = vst.msk [vmem:[#allocation2 + $0x10] sm:$0xff] %vm103, %v101
      %107 = vst.msk [vmem:[#allocation2 + $0x18] sm:$0xff] %vm103, %v102
    $region37: #{lm_regular_product.4} parent=1 // pred_fallthru
      _
    %v108 = vld [vmem:[#allocation3] sm:$0xff]
    %v109 = vld [vmem:[#allocation3 + $0x8] sm:$0xff]
    %v110 = vld [vmem:[#allocation3 + $0x10] sm:$0xff]
    %v111 = vld [vmem:[#allocation3 + $0x18] sm:$0xff]
    %v112 = vld [vmem:[#allocation6] sm:$0xff]
    %v113 = vld [vmem:[#allocation6 + $0x8] sm:$0xff]
    %v114 = vld [vmem:[#allocation6 + $0x10] sm:$0xff]
    %v115 = vld [vmem:[#allocation6 + $0x18] sm:$0xff]
    %v116 = vld [vmem:[#allocation6 + $0x20] sm:$0xff]
    %v117 = vld [vmem:[#allocation6 + $0x28] sm:$0xff]
    %v118 = vld [vmem:[#allocation6 + $0x30] sm:$0xff]
    %v119 = vld [vmem:[#allocation6 + $0x38] sm:$0xff]
    %v120 = vld [vmem:[#allocation6 + $0x40] sm:$0xff]
    %v121 = vld [vmem:[#allocation6 + $0x48] sm:$0xff]
    %v122 = vld [vmem:[#allocation6 + $0x50] sm:$0xff]
    %v123 = vld [vmem:[#allocation6 + $0x58] sm:$0xff]
    %v124 = vld [vmem:[#allocation6 + $0x60] sm:$0xff]
    %v125 = vld [vmem:[#allocation6 + $0x68] sm:$0xff]
    %v126 = vld [vmem:[#allocation6 + $0x70] sm:$0xff]
    %v127 = vld [vmem:[#allocation6 + $0x78] sm:$0xff]
    %v128 = vld [vmem:[#allocation6 + $0x80] sm:$0xff]
    %v129 = vld [vmem:[#allocation6 + $0x88] sm:$0xff]
    %v130 = vld [vmem:[#allocation6 + $0x90] sm:$0xff]
    %v131 = vld [vmem:[#allocation6 + $0x98] sm:$0xff]
    %v132 = vld [vmem:[#allocation6 + $0xa0] sm:$0xff]
    %v133 = vld [vmem:[#allocation6 + $0xa8] sm:$0xff]
    %v134 = vld [vmem:[#allocation6 + $0xb0] sm:$0xff]
    %v135 = vld [vmem:[#allocation6 + $0xb8] sm:$0xff]
    %v136 = vld [vmem:[#allocation6 + $0xc0] sm:$0xff]
    %v137 = vld [vmem:[#allocation6 + $0xc8] sm:$0xff]
    %v138 = vld [vmem:[#allocation6 + $0xd0] sm:$0xff]
    %v139 = vld [vmem:[#allocation6 + $0xd8] sm:$0xff]
    %v140 = vld [vmem:[#allocation6 + $0xe0] sm:$0xff]
    %v141 = vld [vmem:[#allocation6 + $0xe8] sm:$0xff]
    %v142 = vld [vmem:[#allocation6 + $0xf0] sm:$0xff]
    %v143 = vld [vmem:[#allocation6 + $0xf8] sm:$0xff]
    %144 = vmatprep.subr.mxu0 0.0
    %145 = vmatpush1.xpose.msra.mxu0 %v112
    %146 = vmatprep.subr.mxu0 0.0
    %147 = vmatpush1.xpose.msra.mxu0 %v113
    %148 = vmatprep.subr.mxu0 0.0
    %149 = vmatpush1.xpose.msra.mxu0 %v114
    %150 = vmatprep.subr.mxu0 0.0
    %151 = vmatpush1.xpose.msra.mxu0 %v115
    %152 = vmatprep.subr.mxu0 0.0
    %153 = vmatpush1.xpose.msra.mxu0 %v116
    %154 = vmatprep.subr.mxu0 0.0
    %155 = vmatpush1.xpose.msra.mxu0 %v117
    %156 = vmatprep.subr.mxu0 0.0
    %157 = vmatpush1.xpose.msra.mxu0 %v118
    %158 = vmatprep.subr.mxu0 0.0
    %159 = vmatpush1.xpose.msra.mxu0 %v119
    %160 = vmatprep.subr.mxu0 0.0
    %161 = vmatpush1.xpose.msra.mxu0 %v120
    %162 = vmatprep.subr.mxu0 0.0
    %163 = vmatpush1.xpose.msra.mxu0 %v121
    %164 = vmatprep.subr.mxu0 0.0
    %165 = vmatpush1.xpose.msra.mxu0 %v122
    %166 = vmatprep.subr.mxu0 0.0
    %167 = vmatpush1.xpose.msra.mxu0 %v123
    %168 = vmatprep.subr.mxu0 0.0
    %169 = vmatpush1.xpose.msra.mxu0 %v124
    %170 = vmatprep.subr.mxu0 0.0
    %171 = vmatpush1.xpose.msra.mxu0 %v125
    %172 = vmatprep.subr.mxu0 0.0
    %173 = vmatpush1.xpose.msra.mxu0 %v126
    %174 = vmatprep.subr.mxu0 0.0
    %175 = vmatpush1.xpose.msra.mxu0 %v127
    %176 = vmatprep.subr.mxu0 0.0
    %177 = vmatpush1.xpose.msra.mxu0 %v128
    %178 = vmatprep.subr.mxu0 0.0
    %179 = vmatpush1.xpose.msra.mxu0 %v129
    %180 = vmatprep.subr.mxu0 0.0
    %181 = vmatpush1.xpose.msra.mxu0 %v130
    %182 = vmatprep.subr.mxu0 0.0
    %183 = vmatpush1.xpose.msra.mxu0 %v131
    %184 = vmatprep.subr.mxu0 0.0
    %185 = vmatpush1.xpose.msra.mxu0 %v132
    %186 = vmatprep.subr.mxu0 0.0
    %187 = vmatpush1.xpose.msra.mxu0 %v133
    %188 = vmatprep.subr.mxu0 0.0
    %189 = vmatpush1.xpose.msra.mxu0 %v134
    %190 = vmatprep.subr.mxu0 0.0
    %191 = vmatpush1.xpose.msra.mxu0 %v135
    %192 = vmatprep.subr.mxu0 0.0
    %193 = vmatpush1.xpose.msra.mxu0 %v136
    %194 = vmatprep.subr.mxu0 0.0
    %195 = vmatpush1.xpose.msra.mxu0 %v137
    %196 = vmatprep.subr.mxu0 0.0
    %197 = vmatpush1.xpose.msra.mxu0 %v138
    %198 = vmatprep.subr.mxu0 0.0
    %199 = vmatpush1.xpose.msra.mxu0 %v139
    %200 = vmatprep.subr.mxu0 0.0
    %201 = vmatpush1.xpose.msra.mxu0 %v140
    %202 = vmatprep.subr.mxu0 0.0
    %203 = vmatpush1.xpose.msra.mxu0 %v141
    %204 = vmatprep.subr.mxu0 0.0
    %205 = vmatpush1.xpose.msra.mxu0 %v142
    %206 = vmatprep.subr.mxu0 0.0
    %207 = vmatpush1.xpose.msra.mxu0 %v143
    %208 = vmatprep.mubr.f32.mxu0 0.0
    %209 = vmatmul.mubr.f32.gmra.mrb[0].mxu0 %v108
    %v210 = vpop.f32.mrb[0].mxu0
    %v211 = vadd.f32 0.0, %v210
    %v212 = vpop.f32.mrb[0].mxu0
    %v213 = vadd.f32 0.0, %v212
    %214 = vmatprep.mubr.f32.mxu0 0.0
    %215 = vmatmul.mubr.f32.gmra.mrb[0].mxu0 %v109
    %v216 = vpop.f32.mrb[0].mxu0
    %v217 = vadd.f32 0.0, %v216
    %v218 = vpop.f32.mrb[0].mxu0
    %v219 = vadd.f32 0.0, %v218
    %220 = vmatprep.mubr.f32.mxu0 0.0
    %221 = vmatmul.mubr.f32.gmra.mrb[0].mxu0 %v110
    %v222 = vpop.f32.mrb[0].mxu0
    %v223 = vadd.f32 0.0, %v222
    %v224 = vpop.f32.mrb[0].mxu0
    %v225 = vadd.f32 0.0, %v224
    %226 = vmatprep.mubr.f32.mxu0 0.0
    %227 = vmatmul.mubr.f32.gmra.mrb[0].mxu0 %v111
    %v228 = vpop.f32.mrb[0].mxu0
    %v229 = vadd.f32 0.0, %v228
    %v230 = vpop.f32.mrb[0].mxu0
    %v231 = vadd.f32 0.0, %v230
    %232 = vdwg.mxu0
    %v233 = vld [vmem:[#allocation2] sm:$0xff]
    %v234 = vld [vmem:[#allocation2 + $0x8] sm:$0xff]
    %v235 = vld [vmem:[#allocation2 + $0x10] sm:$0xff]
    %v236 = vld [vmem:[#allocation2 + $0x18] sm:$0xff]
    %238 = vset.pattern.permute.xlu0 0
    %239 = vperm.xlu0 %238, %v233
    %v240 = vpop.permute.xlu0 %239
    %243 = vset.pattern.permute.xlu0 0
    %244 = vperm.xlu0 %243, %v234
    %v245 = vpop.permute.xlu0 %244
    %248 = vset.pattern.permute.xlu0 0
    %249 = vperm.xlu0 %248, %v235
    %v250 = vpop.permute.xlu0 %249
    %253 = vset.pattern.permute.xlu0 0
    %254 = vperm.xlu0 %253, %v236
    %v255 = vpop.permute.xlu0 %254
    %v257 = vmul.f32 %v211, %v240
    %v258 = vmul.f32 %v213, %v240
    %v259 = vmul.f32 %v217, %v245
    %v260 = vmul.f32 %v219, %v245
    %v261 = vmul.f32 %v223, %v250
    %v262 = vmul.f32 %v225, %v250
    %v263 = vmul.f32 %v229, %v255
    %v264 = vmul.f32 %v231, %v255
    %v265 = vld [vmem:[#allocation8] sm:$0x3]
    %v267 = vlaneseq
    %v268 = vshrl.u32 %v267, 7
    %v269 = vsub.s32 0, %v268
    %v270 = vrot.slane %v265, %v269
    %v271 = vlaneseq
    %v272 = vshrl.u32 %v271, 7
    %v273 = vsub.s32 1, %v272
    %v274 = vrot.slane %v265, %v273
    %v277 = vmul.f32 %v257, %v270
    %v278 = vmul.f32 %v258, %v274
    %v279 = vmul.f32 %v259, %v270
    %v280 = vmul.f32 %v260, %v274
    %v281 = vmul.f32 %v261, %v270
    %v282 = vmul.f32 %v262, %v274
    %v283 = vmul.f32 %v263, %v270
    %v284 = vmul.f32 %v264, %v274
    %s285 = smul.u32 0, 256
    %v286 = vlaneseq
    %v287 = vand.u32 %v286, 127
    %v288 = vadd.s32 %v287, 128
    %v289 = vstv %s285
    %v290 = vadd.s32 %v289, %v287
    %v291 = vadd.s32 %v289, %v288
    %v292 = vld [vmem:[#allocation9] sm:$0xff]
    %v293 = vld [vmem:[#allocation9 + $0x8] sm:$0xff]
    %v294 = vld [vmem:[#allocation9 + $0x10] sm:$0xff]
    %v295 = vld [vmem:[#allocation9 + $0x18] sm:$0xff]
    %296 = vset.pattern.permute.xlu0 0
    %297 = vperm.xlu0 %296, %v292
    %v298 = vpop.permute.xlu0 %297
    %299 = vset.pattern.permute.xlu0 0
    %300 = vperm.xlu0 %299, %v293
    %v301 = vpop.permute.xlu0 %300
    %302 = vset.pattern.permute.xlu0 0
    %303 = vperm.xlu0 %302, %v294
    %v304 = vpop.permute.xlu0 %303
    %305 = vset.pattern.permute.xlu0 0
    %306 = vperm.xlu0 %305, %v295
    %v307 = vpop.permute.xlu0 %306
    %vm308 = vcmp.eq.s32.totalorder %v290, %v298
    %vm309 = vcmp.eq.s32.totalorder %v291, %v298
    %vm310 = vcmp.eq.s32.totalorder %v290, %v301
    %vm311 = vcmp.eq.s32.totalorder %v291, %v301
    %vm312 = vcmp.eq.s32.totalorder %v290, %v304
    %vm313 = vcmp.eq.s32.totalorder %v291, %v304
    %vm314 = vcmp.eq.s32.totalorder %v290, %v307
    %vm315 = vcmp.eq.s32.totalorder %v291, %v307
    %v316 = vsub.f32 %v277, 12.0
    %v317 = vsub.f32 %v278, 12.0
    %v318 = vsub.f32 %v279, 12.0
    %v319 = vsub.f32 %v280, 12.0
    %v320 = vsub.f32 %v281, 12.0
    %v321 = vsub.f32 %v282, 12.0
    %v322 = vsub.f32 %v283, 12.0
    %v323 = vsub.f32 %v284, 12.0
    %v324 = vsel %vm308, %v316, %v277
    %v325 = vsel %vm309, %v317, %v278
    %v326 = vsel %vm310, %v318, %v279
    %v327 = vsel %vm311, %v319, %v280
    %v328 = vsel %vm312, %v320, %v281
    %v329 = vsel %vm313, %v321, %v282
    %v330 = vsel %vm314, %v322, %v283
    %v331 = vsel %vm315, %v323, %v284
    %332 = vst [vmem:[#allocation11] sm:$0xff] %v324
    %333 = vst [vmem:[#allocation11 + $0x8] sm:$0xff] %v325
    %334 = vst [vmem:[#allocation11 + $0x10] sm:$0xff] %v326
    %335 = vst [vmem:[#allocation11 + $0x18] sm:$0xff] %v327
    %336 = vst [vmem:[#allocation11 + $0x20] sm:$0xff] %v328
    %337 = vst [vmem:[#allocation11 + $0x28] sm:$0xff] %v329
    %338 = vst [vmem:[#allocation11 + $0x30] sm:$0xff] %v330
    %339 = vst [vmem:[#allocation11 + $0x38] sm:$0xff] %v331
    // Predicated region
    $region38: #{lm_regular_product.4} parent=1 // pred_check
      _
    $region39: #{lm_regular_product.4} parent=1 // pred_check_branch
      %341 = sbr.rel (0) target = $region41
    $region40: #{lm_regular_product.4} parent=1 // pred_region
      %s343 = ssub.s32 1024, 1024
      %344 = vsyncadd [#allocation5], %s343
      %s345 = sshll.u32 [#allocation11], 4
      %s346 = int_to_ptr.vmem [resolvable:$true] %s345
      %351 = dma.vmem_to_hbm [thread:$0]  %s346, 1024, %s4, [#allocation5], 256, 256, 16
    $region41: #{lm_regular_product.4} parent=1 // pred_fallthru
      _
    // Predicated region
    $region42: #{lm_regular_product.4} parent=1 // pred_check
      _
    $region43: #{lm_regular_product.4} parent=1 // pred_check_branch
      %353 = sbr.rel (0) target = $region45
    $region44: #{lm_regular_product.4} parent=1 // pred_region
      %354 = dma.done [#allocation5], 1024
    $region45: #{lm_regular_product.4} parent=1 // pred_fallthru
      _
    %355 = vsyncpa [#allocation4], 1
    %356 = vsyncpa [#allocation7], 1
    %357 = vsyncpa [#allocation10], 1
    %358 = vsyncpa [#allocation5], 1

// kernel: lm_regular_product.5
$region0: #{lm_regular_product.5}
  #allocation0 [shape = 'u32[]', space=smem, size = 0x4, offset = 0x4, fixed_abs, tag = 'smem constant byte address 0x4 - core index']
  #allocation1 [shape = 'u32[144,128]{1,0:T(1,128)}', space=vmem, size = 0x12000, scoped, tag = 'internal scratch']
  #allocation2 [shape = 's32[1]{0}', space=sflag, size = 0x4, scoped, tag = 'scoped memory for lm_regular_product.5']
  #allocation3 [shape = 's32[1]{0:T(128)S(6)}', space=smem, size = 0x200, scoped, tag = 'prefetched SMEM operand 0']
  #allocation4 [shape = 's32[1]{0:T(128)S(6)}', space=smem, size = 0x200, scoped, tag = 'prefetched SMEM operand 1']
  %s0 = inlined_call_operand.<no memory space> [shape: s32[1], index: 0, kind: input, shape index: {}, may-alias: {0,1}]
  %s1 = inlined_call_operand.<no memory space> [shape: s32[1], index: 1, kind: input, shape index: {}, may-alias: {0,1}]
  %s2 = inlined_call_operand.hbm [shape: bf16[256,128], index: 2, kind: input, shape index: {}, may-alias: {2,3}]
  %s3 = inlined_call_operand.hbm [shape: bf16[256,128], index: 3, kind: input, shape index: {}, may-alias: {2,3}]
  %s4 = inlined_call_operand.hbm [shape: f32[1,1,256], index: 4, kind: output, shape index: {0}]
  %s5 = inlined_call_operand.hbm [shape: f32[1,256,1], index: 5, kind: output, shape index: {1}]
  %6 = xla_tuple %s4, %s5
  %s7 = sld [smem:[#allocation0]]
  $region34: #{lm_regular_product.5} parent=0
    _
  %s9 = ssub.s32 1, %s7
  %s10 = scalar_select 0, %s9, %s7
  %11 = sst [smem:[#allocation3]] %s0
  %12 = sst [smem:[#allocation4]] %s1
  $region1: #{lm_regular_product.5} parent=0
    #allocation5 [shape = 'u8[65536]{0}', space=vmem, size = 0x10000, scoped, tag = 'input window, operand 2, single buffered']
    #allocation6 [shape = 's32[1]{0}', space=sflag, size = 0x4, scoped, tag = 'scoped memory for lm_regular_product.5']
    #allocation7 [shape = 's32[1]{0}', space=sflag, size = 0x4, scoped, tag = 'scoped memory for lm_regular_product.5']
    #allocation8 [shape = 'u8[65536]{0}', space=vmem, size = 0x10000, scoped, tag = 'input window, operand 3, single buffered']
    #allocation9 [shape = 's32[1]{0}', space=sflag, size = 0x4, scoped, tag = 'scoped memory for lm_regular_product.5']
    #allocation10 [shape = 'u8[1024]{0}', space=vmem, size = 0x400, scoped, tag = 'output window, operand 0, single buffered']
    #allocation11 [shape = 'u8[131072]{0}', space=vmem, size = 0x20000, scoped, tag = 'output window, operand 1, single buffered']
    #allocation12 [shape = 's32[1]{0}', space=sflag, size = 0x4, scoped, tag = 'scoped memory for lm_regular_product.5']
    %13 = vsyncpa [#allocation6], 0
    %14 = vsyncpa [#allocation9], 0
    %15 = vsyncpa [#allocation7], 0
    %16 = vsyncpa [#allocation12], 0
    // Predicated region
    $region2: #{lm_regular_product.5} parent=1 // pred_check
      _
    $region3: #{lm_regular_product.5} parent=1 // pred_check_branch
      %18 = sbr.rel (0) target = $region5
    $region4: #{lm_regular_product.5} parent=1 // pred_region
      %s19 = sld [smem:[#allocation3]]
      %s20 = smul.u32 32, %s19
      %s22 = ssub.s32 2048, 2048
      %23 = vsyncadd [#allocation6], %s22
      %s24 = smul.addr %s20, 64
      %s25 = scalar_lea.hbm %s2, %s24
      %s26 = sshll.u32 [#allocation5], 4
      %s27 = int_to_ptr.vmem [resolvable:$true] %s26
      %32 = dma.hbm_to_vmem [thread:$0]  %s25, 2048, %s27, [#allocation6], 64, 64, 4
    $region5: #{lm_regular_product.5} parent=1 // pred_fallthru
      _
    // Predicated region
    $region6: #{lm_regular_product.5} parent=1 // pred_check
      _
    $region7: #{lm_regular_product.5} parent=1 // pred_check_branch
      %34 = sbr.rel (0) target = $region9
    $region8: #{lm_regular_product.5} parent=1 // pred_region
      %s35 = sld [smem:[#allocation4]]
      %s36 = smul.u32 32, %s35
      %s38 = ssub.s32 2048, 2048
      %39 = vsyncadd [#allocation9], %s38
      %s40 = smul.addr %s36, 64
      %s41 = scalar_lea.hbm %s3, %s40
      %s42 = sshll.u32 [#allocation8], 4
      %s43 = int_to_ptr.vmem [resolvable:$true] %s42
      %48 = dma.hbm_to_vmem [thread:$0]  %s41, 2048, %s43, [#allocation9], 64, 64, 4
    $region9: #{lm_regular_product.5} parent=1 // pred_fallthru
      _
    // Predicated region
    $region10: #{lm_regular_product.5} parent=1 // pred_check
      _
    $region11: #{lm_regular_product.5} parent=1 // pred_check_branch
      %50 = sbr.rel (0) target = $region13
    $region12: #{lm_regular_product.5} parent=1 // pred_region
      %51 = dma.done [#allocation6], 2048
    $region13: #{lm_regular_product.5} parent=1 // pred_fallthru
      _
    // Predicated region
    $region14: #{lm_regular_product.5} parent=1 // pred_check
      _
    $region15: #{lm_regular_product.5} parent=1 // pred_check_branch
      %53 = sbr.rel (0) target = $region17
    $region16: #{lm_regular_product.5} parent=1 // pred_region
      %54 = dma.done [#allocation9], 2048
    $region17: #{lm_regular_product.5} parent=1 // pred_fallthru
      _
    %s55 = sld [smem:[#allocation3]]
    %s56 = smul.u32 32, %s55
    %s57 = sld [smem:[#allocation4]]
    %s58 = smul.u32 32, %s57
    %s60 = sld [smem:[#allocation3]]
    %s61 = sld [smem:[#allocation4]]
    %v62 = vld [vmem:[#allocation5] sm:$0xf]
    %v63 = vld [vmem:[#allocation5 + $0x4] sm:$0xf]
    %v64 = vld [vmem:[#allocation5 + $0x8] sm:$0xf]
    %v65 = vld [vmem:[#allocation5 + $0xc] sm:$0xf]
    %v66 = vld [vmem:[#allocation5 + $0x10] sm:$0xf]
    %v67 = vld [vmem:[#allocation5 + $0x14] sm:$0xf]
    %v68 = vld [vmem:[#allocation5 + $0x18] sm:$0xf]
    %v69 = vld [vmem:[#allocation5 + $0x1c] sm:$0xf]
    %v70 = vld [vmem:[#allocation5 + $0x20] sm:$0xf]
    %v71 = vld [vmem:[#allocation5 + $0x24] sm:$0xf]
    %v72 = vld [vmem:[#allocation5 + $0x28] sm:$0xf]
    %v73 = vld [vmem:[#allocation5 + $0x2c] sm:$0xf]
    %v74 = vld [vmem:[#allocation5 + $0x30] sm:$0xf]
    %v75 = vld [vmem:[#allocation5 + $0x34] sm:$0xf]
    %v76 = vld [vmem:[#allocation5 + $0x38] sm:$0xf]
    %v77 = vld [vmem:[#allocation5 + $0x3c] sm:$0xf]
    %v78 = vld [vmem:[#allocation5 + $0x40] sm:$0xf]
    %v79 = vld [vmem:[#allocation5 + $0x44] sm:$0xf]
    %v80 = vld [vmem:[#allocation5 + $0x48] sm:$0xf]
    %v81 = vld [vmem:[#allocation5 + $0x4c] sm:$0xf]
    %v82 = vld [vmem:[#allocation5 + $0x50] sm:$0xf]
    %v83 = vld [vmem:[#allocation5 + $0x54] sm:$0xf]
    %v84 = vld [vmem:[#allocation5 + $0x58] sm:$0xf]
    %v85 = vld [vmem:[#allocation5 + $0x5c] sm:$0xf]
    %v86 = vld [vmem:[#allocation5 + $0x60] sm:$0xf]
    %v87 = vld [vmem:[#allocation5 + $0x64] sm:$0xf]
    %v88 = vld [vmem:[#allocation5 + $0x68] sm:$0xf]
    %v89 = vld [vmem:[#allocation5 + $0x6c] sm:$0xf]
    %v90 = vld [vmem:[#allocation5 + $0x70] sm:$0xf]
    %v91 = vld [vmem:[#allocation5 + $0x74] sm:$0xf]
    %v92 = vld [vmem:[#allocation5 + $0x78] sm:$0xf]
    %v93 = vld [vmem:[#allocation5 + $0x7c] sm:$0xf]
    %v94 = vld [vmem:[#allocation8] sm:$0xf]
    %v95 = vld [vmem:[#allocation8 + $0x4] sm:$0xf]
    %v96 = vld [vmem:[#allocation8 + $0x8] sm:$0xf]
    %v97 = vld [vmem:[#allocation8 + $0xc] sm:$0xf]
    %v98 = vld [vmem:[#allocation8 + $0x10] sm:$0xf]
    %v99 = vld [vmem:[#allocation8 + $0x14] sm:$0xf]
    %v100 = vld [vmem:[#allocation8 + $0x18] sm:$0xf]
    %v101 = vld [vmem:[#allocation8 + $0x1c] sm:$0xf]
    %v102 = vld [vmem:[#allocation8 + $0x20] sm:$0xf]
    %v103 = vld [vmem:[#allocation8 + $0x24] sm:$0xf]
    %v104 = vld [vmem:[#allocation8 + $0x28] sm:$0xf]
    %v105 = vld [vmem:[#allocation8 + $0x2c] sm:$0xf]
    %v106 = vld [vmem:[#allocation8 + $0x30] sm:$0xf]
    %v107 = vld [vmem:[#allocation8 + $0x34] sm:$0xf]
    %v108 = vld [vmem:[#allocation8 + $0x38] sm:$0xf]
    %v109 = vld [vmem:[#allocation8 + $0x3c] sm:$0xf]
    %v110 = vld [vmem:[#allocation8 + $0x40] sm:$0xf]
    %v111 = vld [vmem:[#allocation8 + $0x44] sm:$0xf]
    %v112 = vld [vmem:[#allocation8 + $0x48] sm:$0xf]
    %v113 = vld [vmem:[#allocation8 + $0x4c] sm:$0xf]
    %v114 = vld [vmem:[#allocation8 + $0x50] sm:$0xf]
    %v115 = vld [vmem:[#allocation8 + $0x54] sm:$0xf]
    %v116 = vld [vmem:[#allocation8 + $0x58] sm:$0xf]
    %v117 = vld [vmem:[#allocation8 + $0x5c] sm:$0xf]
    %v118 = vld [vmem:[#allocation8 + $0x60] sm:$0xf]
    %v119 = vld [vmem:[#allocation8 + $0x64] sm:$0xf]
    %v120 = vld [vmem:[#allocation8 + $0x68] sm:$0xf]
    %v121 = vld [vmem:[#allocation8 + $0x6c] sm:$0xf]
    %v122 = vld [vmem:[#allocation8 + $0x70] sm:$0xf]
    %v123 = vld [vmem:[#allocation8 + $0x74] sm:$0xf]
    %v124 = vld [vmem:[#allocation8 + $0x78] sm:$0xf]
    %v125 = vld [vmem:[#allocation8 + $0x7c] sm:$0xf]
    %v158 = vunpack.c.l.b16 %v62
    %v159 = vunpack.c.l.b16 %v63
    %v160 = vunpack.c.l.b16 %v64
    %v161 = vunpack.c.l.b16 %v65
    %v162 = vunpack.c.l.b16 %v66
    %v163 = vunpack.c.l.b16 %v67
    %v164 = vunpack.c.l.b16 %v68
    %v165 = vunpack.c.l.b16 %v69
    %v166 = vunpack.c.l.b16 %v70
    %v167 = vunpack.c.l.b16 %v71
    %v168 = vunpack.c.l.b16 %v72
    %v169 = vunpack.c.l.b16 %v73
    %v170 = vunpack.c.l.b16 %v74
    %v171 = vunpack.c.l.b16 %v75
    %v172 = vunpack.c.l.b16 %v76
    %v173 = vunpack.c.l.b16 %v77
    %v174 = vunpack.c.l.b16 %v78
    %v175 = vunpack.c.l.b16 %v79
    %v176 = vunpack.c.l.b16 %v80
    %v177 = vunpack.c.l.b16 %v81
    %v178 = vunpack.c.l.b16 %v82
    %v179 = vunpack.c.l.b16 %v83
    %v180 = vunpack.c.l.b16 %v84
    %v181 = vunpack.c.l.b16 %v85
    %v182 = vunpack.c.l.b16 %v86
    %v183 = vunpack.c.l.b16 %v87
    %v184 = vunpack.c.l.b16 %v88
    %v185 = vunpack.c.l.b16 %v89
    %v186 = vunpack.c.l.b16 %v90
    %v187 = vunpack.c.l.b16 %v91
    %v188 = vunpack.c.l.b16 %v92
    %v189 = vunpack.c.l.b16 %v93
    %v190 = vpack.c.b16 %v159, %v158
    %v191 = vpack.c.b16 %v161, %v160
    %v192 = vpack.c.b16 %v163, %v162
    %v193 = vpack.c.b16 %v165, %v164
    %v194 = vpack.c.b16 %v167, %v166
    %v195 = vpack.c.b16 %v169, %v168
    %v196 = vpack.c.b16 %v171, %v170
    %v197 = vpack.c.b16 %v173, %v172
    %v198 = vpack.c.b16 %v175, %v174
    %v199 = vpack.c.b16 %v177, %v176
    %v200 = vpack.c.b16 %v179, %v178
    %v201 = vpack.c.b16 %v181, %v180
    %v202 = vpack.c.b16 %v183, %v182
    %v203 = vpack.c.b16 %v185, %v184
    %v204 = vpack.c.b16 %v187, %v186
    %v205 = vpack.c.b16 %v189, %v188
    %v254 = vunpack.c.l.b16 %v94
    %v255 = vunpack.c.l.b16 %v95
    %v256 = vunpack.c.l.b16 %v96
    %v257 = vunpack.c.l.b16 %v97
    %v258 = vunpack.c.l.b16 %v98
    %v259 = vunpack.c.l.b16 %v99
    %v260 = vunpack.c.l.b16 %v100
    %v261 = vunpack.c.l.b16 %v101
    %v262 = vunpack.c.l.b16 %v102
    %v263 = vunpack.c.l.b16 %v103
    %v264 = vunpack.c.l.b16 %v104
    %v265 = vunpack.c.l.b16 %v105
    %v266 = vunpack.c.l.b16 %v106
    %v267 = vunpack.c.l.b16 %v107
    %v268 = vunpack.c.l.b16 %v108
    %v269 = vunpack.c.l.b16 %v109
    %v270 = vunpack.c.l.b16 %v110
    %v271 = vunpack.c.l.b16 %v111
    %v272 = vunpack.c.l.b16 %v112
    %v273 = vunpack.c.l.b16 %v113
    %v274 = vunpack.c.l.b16 %v114
    %v275 = vunpack.c.l.b16 %v115
    %v276 = vunpack.c.l.b16 %v116
    %v277 = vunpack.c.l.b16 %v117
    %v278 = vunpack.c.l.b16 %v118
    %v279 = vunpack.c.l.b16 %v119
    %v280 = vunpack.c.l.b16 %v120
    %v281 = vunpack.c.l.b16 %v121
    %v282 = vunpack.c.l.b16 %v122
    %v283 = vunpack.c.l.b16 %v123
    %v284 = vunpack.c.l.b16 %v124
    %v285 = vunpack.c.l.b16 %v125
    %v286 = vpack.c.b16 %v255, %v254
    %v287 = vpack.c.b16 %v257, %v256
    %v288 = vpack.c.b16 %v259, %v258
    %v289 = vpack.c.b16 %v261, %v260
    %v290 = vpack.c.b16 %v263, %v262
    %v291 = vpack.c.b16 %v265, %v264
    %v292 = vpack.c.b16 %v267, %v266
    %v293 = vpack.c.b16 %v269, %v268
    %v294 = vpack.c.b16 %v271, %v270
    %v295 = vpack.c.b16 %v273, %v272
    %v296 = vpack.c.b16 %v275, %v274
    %v297 = vpack.c.b16 %v277, %v276
    %v298 = vpack.c.b16 %v279, %v278
    %v299 = vpack.c.b16 %v281, %v280
    %v300 = vpack.c.b16 %v283, %v282
    %v301 = vpack.c.b16 %v285, %v284
    %318 = vmatprep.subr.bf16.mxu0 0
    %319 = vmatpush1.bf16.xpose.msra.mxu0 %v286
    %320 = vmatprep.subr.bf16.mxu0 0
    %321 = vmatpush1.bf16.xpose.msra.mxu0 %v287
    %322 = vmatprep.subr.bf16.mxu0 0
    %323 = vmatpush1.bf16.xpose.msra.mxu0 %v288
    %324 = vmatprep.subr.bf16.mxu0 0
    %325 = vmatpush1.bf16.xpose.msra.mxu0 %v289
    %326 = vmatprep.subr.bf16.mxu0 0
    %327 = vmatpush1.bf16.xpose.msra.mxu0 %v290
    %328 = vmatprep.subr.bf16.mxu0 0
    %329 = vmatpush1.bf16.xpose.msra.mxu0 %v291
    %330 = vmatprep.subr.bf16.mxu0 0
    %331 = vmatpush1.bf16.xpose.msra.mxu0 %v292
    %332 = vmatprep.subr.bf16.mxu0 0
    %333 = vmatpush1.bf16.xpose.msra.mxu0 %v293
    %334 = vmatprep.subr.bf16.mxu0 0
    %335 = vmatpush1.bf16.xpose.msra.mxu0 %v294
    %336 = vmatprep.subr.bf16.mxu0 0
    %337 = vmatpush1.bf16.xpose.msra.mxu0 %v295
    %338 = vmatprep.subr.bf16.mxu0 0
    %339 = vmatpush1.bf16.xpose.msra.mxu0 %v296
    %340 = vmatprep.subr.bf16.mxu0 0
    %341 = vmatpush1.bf16.xpose.msra.mxu0 %v297
    %342 = vmatprep.subr.bf16.mxu0 0
    %343 = vmatpush1.bf16.xpose.msra.mxu0 %v298
    %344 = vmatprep.subr.bf16.mxu0 0
    %345 = vmatpush1.bf16.xpose.msra.mxu0 %v299
    %346 = vmatprep.subr.bf16.mxu0 0
    %347 = vmatpush1.bf16.xpose.msra.mxu0 %v300
    %348 = vmatprep.subr.bf16.mxu0 0
    %349 = vmatpush1.bf16.xpose.msra.mxu0 %v301
    %350 = vmatprep.mubr.bf16.mxu0 0
    %351 = vmatmul.mubr.bf16.gmra.mrb[0].mxu0 %v190
    %v352 = vpop.f32.mrb[0].mxu0
    %v353 = vadd.f32 0.0, %v352
    %v354 = vpop.f32.mrb[0].mxu0
    %v355 = vadd.f32 0.0, %v354
    %v356 = vpop.f32.mrb[0].mxu0
    %v357 = vadd.f32 0.0, %v356
    %v358 = vpop.f32.mrb[0].mxu0
    %v359 = vadd.f32 0.0, %v358
    %360 = vmatprep.mubr.bf16.mxu0 0
    %361 = vmatmul.mubr.bf16.gmra.mrb[0].mxu0 %v191
    %v362 = vpop.f32.mrb[0].mxu0
    %v363 = vadd.f32 0.0, %v362
    %v364 = vpop.f32.mrb[0].mxu0
    %v365 = vadd.f32 0.0, %v364
    %v366 = vpop.f32.mrb[0].mxu0
    %v367 = vadd.f32 0.0, %v366
    %v368 = vpop.f32.mrb[0].mxu0
    %v369 = vadd.f32 0.0, %v368
    %370 = vmatprep.mubr.bf16.mxu0 0
    %371 = vmatmul.mubr.bf16.gmra.mrb[0].mxu0 %v192
    %v372 = vpop.f32.mrb[0].mxu0
    %v373 = vadd.f32 0.0, %v372
    %v374 = vpop.f32.mrb[0].mxu0
    %v375 = vadd.f32 0.0, %v374
    %v376 = vpop.f32.mrb[0].mxu0
    %v377 = vadd.f32 0.0, %v376
    %v378 = vpop.f32.mrb[0].mxu0
    %v379 = vadd.f32 0.0, %v378
    %380 = vmatprep.mubr.bf16.mxu0 0
    %381 = vmatmul.mubr.bf16.gmra.mrb[0].mxu0 %v193
    %v382 = vpop.f32.mrb[0].mxu0
    %v383 = vadd.f32 0.0, %v382
    %v384 = vpop.f32.mrb[0].mxu0
    %v385 = vadd.f32 0.0, %v384
    %v386 = vpop.f32.mrb[0].mxu0
    %v387 = vadd.f32 0.0, %v386
    %v388 = vpop.f32.mrb[0].mxu0
    %v389 = vadd.f32 0.0, %v388
    %390 = vmatprep.mubr.bf16.mxu0 0
    %391 = vmatmul.mubr.bf16.gmra.mrb[0].mxu0 %v194
    %v392 = vpop.f32.mrb[0].mxu0
    %v393 = vadd.f32 0.0, %v392
    %v394 = vpop.f32.mrb[0].mxu0
    %v395 = vadd.f32 0.0, %v394
    %v396 = vpop.f32.mrb[0].mxu0
    %v397 = vadd.f32 0.0, %v396
    %v398 = vpop.f32.mrb[0].mxu0
    %v399 = vadd.f32 0.0, %v398
    %400 = vmatprep.mubr.bf16.mxu0 0
    %401 = vmatmul.mubr.bf16.gmra.mrb[0].mxu0 %v195
    %v402 = vpop.f32.mrb[0].mxu0
    %v403 = vadd.f32 0.0, %v402
    %v404 = vpop.f32.mrb[0].mxu0
    %v405 = vadd.f32 0.0, %v404
    %v406 = vpop.f32.mrb[0].mxu0
    %v407 = vadd.f32 0.0, %v406
    %v408 = vpop.f32.mrb[0].mxu0
    %v409 = vadd.f32 0.0, %v408
    %410 = vmatprep.mubr.bf16.mxu0 0
    %411 = vmatmul.mubr.bf16.gmra.mrb[0].mxu0 %v196
    %v412 = vpop.f32.mrb[0].mxu0
    %v413 = vadd.f32 0.0, %v412
    %v414 = vpop.f32.mrb[0].mxu0
    %v415 = vadd.f32 0.0, %v414
    %v416 = vpop.f32.mrb[0].mxu0
    %v417 = vadd.f32 0.0, %v416
    %v418 = vpop.f32.mrb[0].mxu0
    %v419 = vadd.f32 0.0, %v418
    %420 = vmatprep.mubr.bf16.mxu0 0
    %421 = vmatmul.mubr.bf16.gmra.mrb[0].mxu0 %v197
    %v422 = vpop.f32.mrb[0].mxu0
    %v423 = vadd.f32 0.0, %v422
    %v424 = vpop.f32.mrb[0].mxu0
    %v425 = vadd.f32 0.0, %v424
    %v426 = vpop.f32.mrb[0].mxu0
    %v427 = vadd.f32 0.0, %v426
    %v428 = vpop.f32.mrb[0].mxu0
    %v429 = vadd.f32 0.0, %v428
    %430 = vmatprep.mubr.bf16.mxu0 0
    %431 = vmatmul.mubr.bf16.gmra.mrb[0].mxu0 %v198
    %v432 = vpop.f32.mrb[0].mxu0
    %v433 = vadd.f32 0.0, %v432
    %v434 = vpop.f32.mrb[0].mxu0
    %v435 = vadd.f32 0.0, %v434
    %v436 = vpop.f32.mrb[0].mxu0
    %v437 = vadd.f32 0.0, %v436
    %v438 = vpop.f32.mrb[0].mxu0
    %v439 = vadd.f32 0.0, %v438
    %440 = vmatprep.mubr.bf16.mxu0 0
    %441 = vmatmul.mubr.bf16.gmra.mrb[0].mxu0 %v199
    %v442 = vpop.f32.mrb[0].mxu0
    %v443 = vadd.f32 0.0, %v442
    %v444 = vpop.f32.mrb[0].mxu0
    %v445 = vadd.f32 0.0, %v444
    %v446 = vpop.f32.mrb[0].mxu0
    %v447 = vadd.f32 0.0, %v446
    %v448 = vpop.f32.mrb[0].mxu0
    %v449 = vadd.f32 0.0, %v448
    %450 = vmatprep.mubr.bf16.mxu0 0
    %451 = vmatmul.mubr.bf16.gmra.mrb[0].mxu0 %v200
    %v452 = vpop.f32.mrb[0].mxu0
    %v453 = vadd.f32 0.0, %v452
    %v454 = vpop.f32.mrb[0].mxu0
    %v455 = vadd.f32 0.0, %v454
    %v456 = vpop.f32.mrb[0].mxu0
    %v457 = vadd.f32 0.0, %v456
    %v458 = vpop.f32.mrb[0].mxu0
    %v459 = vadd.f32 0.0, %v458
    %460 = vmatprep.mubr.bf16.mxu0 0
    %461 = vmatmul.mubr.bf16.gmra.mrb[0].mxu0 %v201
    %v462 = vpop.f32.mrb[0].mxu0
    %v463 = vadd.f32 0.0, %v462
    %v464 = vpop.f32.mrb[0].mxu0
    %v465 = vadd.f32 0.0, %v464
    %v466 = vpop.f32.mrb[0].mxu0
    %v467 = vadd.f32 0.0, %v466
    %v468 = vpop.f32.mrb[0].mxu0
    %v469 = vadd.f32 0.0, %v468
    %470 = vmatprep.mubr.bf16.mxu0 0
    %471 = vmatmul.mubr.bf16.gmra.mrb[0].mxu0 %v202
    %v472 = vpop.f32.mrb[0].mxu0
    %v473 = vadd.f32 0.0, %v472
    %v474 = vpop.f32.mrb[0].mxu0
    %v475 = vadd.f32 0.0, %v474
    %v476 = vpop.f32.mrb[0].mxu0
    %v477 = vadd.f32 0.0, %v476
    %v478 = vpop.f32.mrb[0].mxu0
    %v479 = vadd.f32 0.0, %v478
    %480 = vmatprep.mubr.bf16.mxu0 0
    %481 = vmatmul.mubr.bf16.gmra.mrb[0].mxu0 %v203
    %v482 = vpop.f32.mrb[0].mxu0
    %v483 = vadd.f32 0.0, %v482
    %v484 = vpop.f32.mrb[0].mxu0
    %v485 = vadd.f32 0.0, %v484
    %v486 = vpop.f32.mrb[0].mxu0
    %v487 = vadd.f32 0.0, %v486
    %v488 = vpop.f32.mrb[0].mxu0
    %v489 = vadd.f32 0.0, %v488
    %490 = vmatprep.mubr.bf16.mxu0 0
    %491 = vmatmul.mubr.bf16.gmra.mrb[0].mxu0 %v204
    %v492 = vpop.f32.mrb[0].mxu0
    %v493 = vadd.f32 0.0, %v492
    %v494 = vpop.f32.mrb[0].mxu0
    %v495 = vadd.f32 0.0, %v494
    %v496 = vpop.f32.mrb[0].mxu0
    %v497 = vadd.f32 0.0, %v496
    %v498 = vpop.f32.mrb[0].mxu0
    %v499 = vadd.f32 0.0, %v498
    %500 = vmatprep.mubr.bf16.mxu0 0
    %501 = vmatmul.mubr.bf16.gmra.mrb[0].mxu0 %v205
    %v502 = vpop.f32.mrb[0].mxu0
    %v503 = vadd.f32 0.0, %v502
    %v504 = vpop.f32.mrb[0].mxu0
    %v505 = vadd.f32 0.0, %v504
    %v506 = vpop.f32.mrb[0].mxu0
    %v507 = vadd.f32 0.0, %v506
    %v508 = vpop.f32.mrb[0].mxu0
    %v509 = vadd.f32 0.0, %v508
    %510 = vdwg.mxu0
    %v511 = vmax.f32 %v353, -1.0
    %v512 = vmax.f32 %v355, -1.0
    %v513 = vmax.f32 %v357, -1.0
    %v514 = vmax.f32 %v359, -1.0
    %v515 = vmax.f32 %v363, -1.0
    %v516 = vmax.f32 %v365, -1.0
    %v517 = vmax.f32 %v367, -1.0
    %v518 = vmax.f32 %v369, -1.0
    %v519 = vmax.f32 %v373, -1.0
    %v520 = vmax.f32 %v375, -1.0
    %v521 = vmax.f32 %v377, -1.0
    %v522 = vmax.f32 %v379, -1.0
    %v523 = vmax.f32 %v383, -1.0
    %v524 = vmax.f32 %v385, -1.0
    %v525 = vmax.f32 %v387, -1.0
    %v526 = vmax.f32 %v389, -1.0
    %v527 = vmax.f32 %v393, -1.0
    %v528 = vmax.f32 %v395, -1.0
    %v529 = vmax.f32 %v397, -1.0
    %v530 = vmax.f32 %v399, -1.0
    %v531 = vmax.f32 %v403, -1.0
    %v532 = vmax.f32 %v405, -1.0
    %v533 = vmax.f32 %v407, -1.0
    %v534 = vmax.f32 %v409, -1.0
    %v535 = vmax.f32 %v413, -1.0
    %v536 = vmax.f32 %v415, -1.0
    %v537 = vmax.f32 %v417, -1.0
    %v538 = vmax.f32 %v419, -1.0
    %v539 = vmax.f32 %v423, -1.0
    %v540 = vmax.f32 %v425, -1.0
    %v541 = vmax.f32 %v427, -1.0
    %v542 = vmax.f32 %v429, -1.0
    %v543 = vmax.f32 %v433, -1.0
    %v544 = vmax.f32 %v435, -1.0
    %v545 = vmax.f32 %v437, -1.0
    %v546 = vmax.f32 %v439, -1.0
    %v547 = vmax.f32 %v443, -1.0
    %v548 = vmax.f32 %v445, -1.0
    %v549 = vmax.f32 %v447, -1.0
    %v550 = vmax.f32 %v449, -1.0
    %v551 = vmax.f32 %v453, -1.0
    %v552 = vmax.f32 %v455, -1.0
    %v553 = vmax.f32 %v457, -1.0
    %v554 = vmax.f32 %v459, -1.0
    %v555 = vmax.f32 %v463, -1.0
    %v556 = vmax.f32 %v465, -1.0
    %v557 = vmax.f32 %v467, -1.0
    %v558 = vmax.f32 %v469, -1.0
    %v559 = vmax.f32 %v473, -1.0
    %v560 = vmax.f32 %v475, -1.0
    %v561 = vmax.f32 %v477, -1.0
    %v562 = vmax.f32 %v479, -1.0
    %v563 = vmax.f32 %v483, -1.0
    %v564 = vmax.f32 %v485, -1.0
    %v565 = vmax.f32 %v487, -1.0
    %v566 = vmax.f32 %v489, -1.0
    %v567 = vmax.f32 %v493, -1.0
    %v568 = vmax.f32 %v495, -1.0
    %v569 = vmax.f32 %v497, -1.0
    %v570 = vmax.f32 %v499, -1.0
    %v571 = vmax.f32 %v503, -1.0
    %v572 = vmax.f32 %v505, -1.0
    %v573 = vmax.f32 %v507, -1.0
    %v574 = vmax.f32 %v509, -1.0
    %v575 = vmin.f32 %v511, 1.0
    %v576 = vmin.f32 %v512, 1.0
    %v577 = vmin.f32 %v513, 1.0
    %v578 = vmin.f32 %v514, 1.0
    %v579 = vmin.f32 %v515, 1.0
    %v580 = vmin.f32 %v516, 1.0
    %v581 = vmin.f32 %v517, 1.0
    %v582 = vmin.f32 %v518, 1.0
    %v583 = vmin.f32 %v519, 1.0
    %v584 = vmin.f32 %v520, 1.0
    %v585 = vmin.f32 %v521, 1.0
    %v586 = vmin.f32 %v522, 1.0
    %v587 = vmin.f32 %v523, 1.0
    %v588 = vmin.f32 %v524, 1.0
    %v589 = vmin.f32 %v525, 1.0
    %v590 = vmin.f32 %v526, 1.0
    %v591 = vmin.f32 %v527, 1.0
    %v592 = vmin.f32 %v528, 1.0
    %v593 = vmin.f32 %v529, 1.0
    %v594 = vmin.f32 %v530, 1.0
    %v595 = vmin.f32 %v531, 1.0
    %v596 = vmin.f32 %v532, 1.0
    %v597 = vmin.f32 %v533, 1.0
    %v598 = vmin.f32 %v534, 1.0
    %v599 = vmin.f32 %v535, 1.0
    %v600 = vmin.f32 %v536, 1.0
    %v601 = vmin.f32 %v537, 1.0
    %v602 = vmin.f32 %v538, 1.0
    %v603 = vmin.f32 %v539, 1.0
    %v604 = vmin.f32 %v540, 1.0
    %v605 = vmin.f32 %v541, 1.0
    %v606 = vmin.f32 %v542, 1.0
    %v607 = vmin.f32 %v543, 1.0
    %v608 = vmin.f32 %v544, 1.0
    %v609 = vmin.f32 %v545, 1.0
    %v610 = vmin.f32 %v546, 1.0
    %v611 = vmin.f32 %v547, 1.0
    %v612 = vmin.f32 %v548, 1.0
    %v613 = vmin.f32 %v549, 1.0
    %v614 = vmin.f32 %v550, 1.0
    %v615 = vmin.f32 %v551, 1.0
    %v616 = vmin.f32 %v552, 1.0
    %v617 = vmin.f32 %v553, 1.0
    %v618 = vmin.f32 %v554, 1.0
    %v619 = vmin.f32 %v555, 1.0
    %v620 = vmin.f32 %v556, 1.0
    %v621 = vmin.f32 %v557, 1.0
    %v622 = vmin.f32 %v558, 1.0
    %v623 = vmin.f32 %v559, 1.0
    %v624 = vmin.f32 %v560, 1.0
    %v625 = vmin.f32 %v561, 1.0
    %v626 = vmin.f32 %v562, 1.0
    %v627 = vmin.f32 %v563, 1.0
    %v628 = vmin.f32 %v564, 1.0
    %v629 = vmin.f32 %v565, 1.0
    %v630 = vmin.f32 %v566, 1.0
    %v631 = vmin.f32 %v567, 1.0
    %v632 = vmin.f32 %v568, 1.0
    %v633 = vmin.f32 %v569, 1.0
    %v634 = vmin.f32 %v570, 1.0
    %v635 = vmin.f32 %v571, 1.0
    %v636 = vmin.f32 %v572, 1.0
    %v637 = vmin.f32 %v573, 1.0
    %v638 = vmin.f32 %v574, 1.0
    %s639 = smul.u32 %s60, 256
    %v640 = vlaneseq
    %v641 = vshrl.u32 %v640, 7
    %v642 = vadd.s32 %v641, 8
    %v643 = vadd.s32 %v641, 16
    %v644 = vadd.s32 %v641, 24
    %v645 = vadd.s32 %v641, 32
    %v646 = vadd.s32 %v641, 40
    %v647 = vadd.s32 %v641, 48
    %v648 = vadd.s32 %v641, 56
    %v649 = vadd.s32 %v641, 64
    %v650 = vadd.s32 %v641, 72
    %v651 = vadd.s32 %v641, 80
    %v652 = vadd.s32 %v641, 88
    %v653 = vadd.s32 %v641, 96
    %v654 = vadd.s32 %v641, 104
    %v655 = vadd.s32 %v641, 112
    %v656 = vadd.s32 %v641, 120
    %v657 = vadd.s32 %v641, 128
    %v658 = vadd.s32 %v641, 136
    %v659 = vadd.s32 %v641, 144
    %v660 = vadd.s32 %v641, 152
    %v661 = vadd.s32 %v641, 160
    %v662 = vadd.s32 %v641, 168
    %v663 = vadd.s32 %v641, 176
    %v664 = vadd.s32 %v641, 184
    %v665 = vadd.s32 %v641, 192
    %v666 = vadd.s32 %v641, 200
    %v667 = vadd.s32 %v641, 208
    %v668 = vadd.s32 %v641, 216
    %v669 = vadd.s32 %v641, 224
    %v670 = vadd.s32 %v641, 232
    %v671 = vadd.s32 %v641, 240
    %v672 = vadd.s32 %v641, 248
    %v673 = vstv %s639
    %v674 = vadd.s32 %v673, %v641
    %v675 = vadd.s32 %v673, %v642
    %v676 = vadd.s32 %v673, %v643
    %v677 = vadd.s32 %v673, %v644
    %v678 = vadd.s32 %v673, %v645
    %v679 = vadd.s32 %v673, %v646
    %v680 = vadd.s32 %v673, %v647
    %v681 = vadd.s32 %v673, %v648
    %v682 = vadd.s32 %v673, %v649
    %v683 = vadd.s32 %v673, %v650
    %v684 = vadd.s32 %v673, %v651
    %v685 = vadd.s32 %v673, %v652
    %v686 = vadd.s32 %v673, %v653
    %v687 = vadd.s32 %v673, %v654
    %v688 = vadd.s32 %v673, %v655
    %v689 = vadd.s32 %v673, %v656
    %v690 = vadd.s32 %v673, %v657
    %v691 = vadd.s32 %v673, %v658
    %v692 = vadd.s32 %v673, %v659
    %v693 = vadd.s32 %v673, %v660
    %v694 = vadd.s32 %v673, %v661
    %v695 = vadd.s32 %v673, %v662
    %v696 = vadd.s32 %v673, %v663
    %v697 = vadd.s32 %v673, %v664
    %v698 = vadd.s32 %v673, %v665
    %v699 = vadd.s32 %v673, %v666
    %v700 = vadd.s32 %v673, %v667
    %v701 = vadd.s32 %v673, %v668
    %v702 = vadd.s32 %v673, %v669
    %v703 = vadd.s32 %v673, %v670
    %v704 = vadd.s32 %v673, %v671
    %v705 = vadd.s32 %v673, %v672
    %s706 = smul.u32 %s61, 256
    %v707 = vlaneseq
    %v708 = vand.u32 %v707, 127
    %v709 = vadd.s32 %v708, 128
    %v710 = vstv %s706
    %v711 = vadd.s32 %v710, %v708
    %v712 = vadd.s32 %v710, %v709
    %vm713 = vcmp.ne.s32.totalorder %v674, %v711
    %vm714 = vcmp.ne.s32.totalorder %v674, %v712
    %vm715 = vcmp.ne.s32.totalorder %v675, %v711
    %vm716 = vcmp.ne.s32.totalorder %v675, %v712
    %vm717 = vcmp.ne.s32.totalorder %v676, %v711
    %vm718 = vcmp.ne.s32.totalorder %v676, %v712
    %vm719 = vcmp.ne.s32.totalorder %v677, %v711
    %vm720 = vcmp.ne.s32.totalorder %v677, %v712
    %vm721 = vcmp.ne.s32.totalorder %v678, %v711
    %vm722 = vcmp.ne.s32.totalorder %v678, %v712
    %vm723 = vcmp.ne.s32.totalorder %v679, %v711
    %vm724 = vcmp.ne.s32.totalorder %v679, %v712
    %vm725 = vcmp.ne.s32.totalorder %v680, %v711
    %vm726 = vcmp.ne.s32.totalorder %v680, %v712
    %vm727 = vcmp.ne.s32.totalorder %v681, %v711
    %vm728 = vcmp.ne.s32.totalorder %v681, %v712
    %vm729 = vcmp.ne.s32.totalorder %v682, %v711
    %vm730 = vcmp.ne.s32.totalorder %v682, %v712
    %vm731 = vcmp.ne.s32.totalorder %v683, %v711
    %vm732 = vcmp.ne.s32.totalorder %v683, %v712
    %vm733 = vcmp.ne.s32.totalorder %v684, %v711
    %vm734 = vcmp.ne.s32.totalorder %v684, %v712
    %vm735 = vcmp.ne.s32.totalorder %v685, %v711
    %vm736 = vcmp.ne.s32.totalorder %v685, %v712
    %vm737 = vcmp.ne.s32.totalorder %v686, %v711
    %vm738 = vcmp.ne.s32.totalorder %v686, %v712
    %vm739 = vcmp.ne.s32.totalorder %v687, %v711
    %vm740 = vcmp.ne.s32.totalorder %v687, %v712
    %vm741 = vcmp.ne.s32.totalorder %v688, %v711
    %vm742 = vcmp.ne.s32.totalorder %v688, %v712
    %vm743 = vcmp.ne.s32.totalorder %v689, %v711
    %vm744 = vcmp.ne.s32.totalorder %v689, %v712
    %vm745 = vcmp.ne.s32.totalorder %v690, %v711
    %vm746 = vcmp.ne.s32.totalorder %v690, %v712
    %vm747 = vcmp.ne.s32.totalorder %v691, %v711
    %vm748 = vcmp.ne.s32.totalorder %v691, %v712
    %vm749 = vcmp.ne.s32.totalorder %v692, %v711
    %vm750 = vcmp.ne.s32.totalorder %v692, %v712
    %vm751 = vcmp.ne.s32.totalorder %v693, %v711
    %vm752 = vcmp.ne.s32.totalorder %v693, %v712
    %vm753 = vcmp.ne.s32.totalorder %v694, %v711
    %vm754 = vcmp.ne.s32.totalorder %v694, %v712
    %vm755 = vcmp.ne.s32.totalorder %v695, %v711
    %vm756 = vcmp.ne.s32.totalorder %v695, %v712
    %vm757 = vcmp.ne.s32.totalorder %v696, %v711
    %vm758 = vcmp.ne.s32.totalorder %v696, %v712
    %vm759 = vcmp.ne.s32.totalorder %v697, %v711
    %vm760 = vcmp.ne.s32.totalorder %v697, %v712
    %vm761 = vcmp.ne.s32.totalorder %v698, %v711
    %vm762 = vcmp.ne.s32.totalorder %v698, %v712
    %vm763 = vcmp.ne.s32.totalorder %v699, %v711
    %vm764 = vcmp.ne.s32.totalorder %v699, %v712
    %vm765 = vcmp.ne.s32.totalorder %v700, %v711
    %vm766 = vcmp.ne.s32.totalorder %v700, %v712
    %vm767 = vcmp.ne.s32.totalorder %v701, %v711
    %vm768 = vcmp.ne.s32.totalorder %v701, %v712
    %vm769 = vcmp.ne.s32.totalorder %v702, %v711
    %vm770 = vcmp.ne.s32.totalorder %v702, %v712
    %vm771 = vcmp.ne.s32.totalorder %v703, %v711
    %vm772 = vcmp.ne.s32.totalorder %v703, %v712
    %vm773 = vcmp.ne.s32.totalorder %v704, %v711
    %vm774 = vcmp.ne.s32.totalorder %v704, %v712
    %vm775 = vcmp.ne.s32.totalorder %v705, %v711
    %vm776 = vcmp.ne.s32.totalorder %v705, %v712
    %vm777 = vcmp.lt.s32.totalorder %v674, 256
    %vm778 = vcmp.lt.s32.totalorder %v675, 256
    %vm779 = vcmp.lt.s32.totalorder %v676, 256
    %vm780 = vcmp.lt.s32.totalorder %v677, 256
    %vm781 = vcmp.lt.s32.totalorder %v678, 256
    %vm782 = vcmp.lt.s32.totalorder %v679, 256
    %vm783 = vcmp.lt.s32.totalorder %v680, 256
    %vm784 = vcmp.lt.s32.totalorder %v681, 256
    %vm785 = vcmp.lt.s32.totalorder %v682, 256
    %vm786 = vcmp.lt.s32.totalorder %v683, 256
    %vm787 = vcmp.lt.s32.totalorder %v684, 256
    %vm788 = vcmp.lt.s32.totalorder %v685, 256
    %vm789 = vcmp.lt.s32.totalorder %v686, 256
    %vm790 = vcmp.lt.s32.totalorder %v687, 256
    %vm791 = vcmp.lt.s32.totalorder %v688, 256
    %vm792 = vcmp.lt.s32.totalorder %v689, 256
    %vm793 = vcmp.lt.s32.totalorder %v690, 256
    %vm794 = vcmp.lt.s32.totalorder %v691, 256
    %vm795 = vcmp.lt.s32.totalorder %v692, 256
    %vm796 = vcmp.lt.s32.totalorder %v693, 256
    %vm797 = vcmp.lt.s32.totalorder %v694, 256
    %vm798 = vcmp.lt.s32.totalorder %v695, 256
    %vm799 = vcmp.lt.s32.totalorder %v696, 256
    %vm800 = vcmp.lt.s32.totalorder %v697, 256
    %vm801 = vcmp.lt.s32.totalorder %v698, 256
    %vm802 = vcmp.lt.s32.totalorder %v699, 256
    %vm803 = vcmp.lt.s32.totalorder %v700, 256
    %vm804 = vcmp.lt.s32.totalorder %v701, 256
    %vm805 = vcmp.lt.s32.totalorder %v702, 256
    %vm806 = vcmp.lt.s32.totalorder %v703, 256
    %vm807 = vcmp.lt.s32.totalorder %v704, 256
    %vm808 = vcmp.lt.s32.totalorder %v705, 256
    %vm809 = vmand %vm713, %vm777
    %vm810 = vmand %vm714, %vm777
    %vm811 = vmand %vm715, %vm778
    %vm812 = vmand %vm716, %vm778
    %vm813 = vmand %vm717, %vm779
    %vm814 = vmand %vm718, %vm779
    %vm815 = vmand %vm719, %vm780
    %vm816 = vmand %vm720, %vm780
    %vm817 = vmand %vm721, %vm781
    %vm818 = vmand %vm722, %vm781
    %vm819 = vmand %vm723, %vm782
    %vm820 = vmand %vm724, %vm782
    %vm821 = vmand %vm725, %vm783
    %vm822 = vmand %vm726, %vm783
    %vm823 = vmand %vm727, %vm784
    %vm824 = vmand %vm728, %vm784
    %vm825 = vmand %vm729, %vm785
    %vm826 = vmand %vm730, %vm785
    %vm827 = vmand %vm731, %vm786
    %vm828 = vmand %vm732, %vm786
    %vm829 = vmand %vm733, %vm787
    %vm830 = vmand %vm734, %vm787
    %vm831 = vmand %vm735, %vm788
    %vm832 = vmand %vm736, %vm788
    %vm833 = vmand %vm737, %vm789
    %vm834 = vmand %vm738, %vm789
    %vm835 = vmand %vm739, %vm790
    %vm836 = vmand %vm740, %vm790
    %vm837 = vmand %vm741, %vm791
    %vm838 = vmand %vm742, %vm791
    %vm839 = vmand %vm743, %vm792
    %vm840 = vmand %vm744, %vm792
    %vm841 = vmand %vm745, %vm793
    %vm842 = vmand %vm746, %vm793
    %vm843 = vmand %vm747, %vm794
    %vm844 = vmand %vm748, %vm794
    %vm845 = vmand %vm749, %vm795
    %vm846 = vmand %vm750, %vm795
    %vm847 = vmand %vm751, %vm796
    %vm848 = vmand %vm752, %vm796
    %vm849 = vmand %vm753, %vm797
    %vm850 = vmand %vm754, %vm797
    %vm851 = vmand %vm755, %vm798
    %vm852 = vmand %vm756, %vm798
    %vm853 = vmand %vm757, %vm799
    %vm854 = vmand %vm758, %vm799
    %vm855 = vmand %vm759, %vm800
    %vm856 = vmand %vm760, %vm800
    %vm857 = vmand %vm761, %vm801
    %vm858 = vmand %vm762, %vm801
    %vm859 = vmand %vm763, %vm802
    %vm860 = vmand %vm764, %vm802
    %vm861 = vmand %vm765, %vm803
    %vm862 = vmand %vm766, %vm803
    %vm863 = vmand %vm767, %vm804
    %vm864 = vmand %vm768, %vm804
    %vm865 = vmand %vm769, %vm805
    %vm866 = vmand %vm770, %vm805
    %vm867 = vmand %vm771, %vm806
    %vm868 = vmand %vm772, %vm806
    %vm869 = vmand %vm773, %vm807
    %vm870 = vmand %vm774, %vm807
    %vm871 = vmand %vm775, %vm808
    %vm872 = vmand %vm776, %vm808
    %vm873 = vcmp.lt.s32.totalorder %v711, 256
    %vm874 = vcmp.lt.s32.totalorder %v712, 256
    %vm875 = vmand %vm809, %vm873
    %vm876 = vmand %vm810, %vm874
    %vm877 = vmand %vm811, %vm873
    %vm878 = vmand %vm812, %vm874
    %vm879 = vmand %vm813, %vm873
    %vm880 = vmand %vm814, %vm874
    %vm881 = vmand %vm815, %vm873
    %vm882 = vmand %vm816, %vm874
    %vm883 = vmand %vm817, %vm873
    %vm884 = vmand %vm818, %vm874
    %vm885 = vmand %vm819, %vm873
    %vm886 = vmand %vm820, %vm874
    %vm887 = vmand %vm821, %vm873
    %vm888 = vmand %vm822, %vm874
    %vm889 = vmand %vm823, %vm873
    %vm890 = vmand %vm824, %vm874
    %vm891 = vmand %vm825, %vm873
    %vm892 = vmand %vm826, %vm874
    %vm893 = vmand %vm827, %vm873
    %vm894 = vmand %vm828, %vm874
    %vm895 = vmand %vm829, %vm873
    %vm896 = vmand %vm830, %vm874
    %vm897 = vmand %vm831, %vm873
    %vm898 = vmand %vm832, %vm874
    %vm899 = vmand %vm833, %vm873
    %vm900 = vmand %vm834, %vm874
    %vm901 = vmand %vm835, %vm873
    %vm902 = vmand %vm836, %vm874
    %vm903 = vmand %vm837, %vm873
    %vm904 = vmand %vm838, %vm874
    %vm905 = vmand %vm839, %vm873
    %vm906 = vmand %vm840, %vm874
    %vm907 = vmand %vm841, %vm873
    %vm908 = vmand %vm842, %vm874
    %vm909 = vmand %vm843, %vm873
    %vm910 = vmand %vm844, %vm874
    %vm911 = vmand %vm845, %vm873
    %vm912 = vmand %vm846, %vm874
    %vm913 = vmand %vm847, %vm873
    %vm914 = vmand %vm848, %vm874
    %vm915 = vmand %vm849, %vm873
    %vm916 = vmand %vm850, %vm874
    %vm917 = vmand %vm851, %vm873
    %vm918 = vmand %vm852, %vm874
    %vm919 = vmand %vm853, %vm873
    %vm920 = vmand %vm854, %vm874
    %vm921 = vmand %vm855, %vm873
    %vm922 = vmand %vm856, %vm874
    %vm923 = vmand %vm857, %vm873
    %vm924 = vmand %vm858, %vm874
    %vm925 = vmand %vm859, %vm873
    %vm926 = vmand %vm860, %vm874
    %vm927 = vmand %vm861, %vm873
    %vm928 = vmand %vm862, %vm874
    %vm929 = vmand %vm863, %vm873
    %vm930 = vmand %vm864, %vm874
    %vm931 = vmand %vm865, %vm873
    %vm932 = vmand %vm866, %vm874
    %vm933 = vmand %vm867, %vm873
    %vm934 = vmand %vm868, %vm874
    %vm935 = vmand %vm869, %vm873
    %vm936 = vmand %vm870, %vm874
    %vm937 = vmand %vm871, %vm873
    %vm938 = vmand %vm872, %vm874
    %v939 = vsel %vm875, %v575, -inf
    %v940 = vsel %vm876, %v576, -inf
    %v941 = vsel %vm877, %v577, -inf
    %v942 = vsel %vm878, %v578, -inf
    %v943 = vsel %vm879, %v579, -inf
    %v944 = vsel %vm880, %v580, -inf
    %v945 = vsel %vm881, %v581, -inf
    %v946 = vsel %vm882, %v582, -inf
    %v947 = vsel %vm883, %v583, -inf
    %v948 = vsel %vm884, %v584, -inf
    %v949 = vsel %vm885, %v585, -inf
    %v950 = vsel %vm886, %v586, -inf
    %v951 = vsel %vm887, %v587, -inf
    %v952 = vsel %vm888, %v588, -inf
    %v953 = vsel %vm889, %v589, -inf
    %v954 = vsel %vm890, %v590, -inf
    %v955 = vsel %vm891, %v591, -inf
    %v956 = vsel %vm892, %v592, -inf
    %v957 = vsel %vm893, %v593, -inf
    %v958 = vsel %vm894, %v594, -inf
    %v959 = vsel %vm895, %v595, -inf
    %v960 = vsel %vm896, %v596, -inf
    %v961 = vsel %vm897, %v597, -inf
    %v962 = vsel %vm898, %v598, -inf
    %v963 = vsel %vm899, %v599, -inf
    %v964 = vsel %vm900, %v600, -inf
    %v965 = vsel %vm901, %v601, -inf
    %v966 = vsel %vm902, %v602, -inf
    %v967 = vsel %vm903, %v603, -inf
    %v968 = vsel %vm904, %v604, -inf
    %v969 = vsel %vm905, %v605, -inf
    %v970 = vsel %vm906, %v606, -inf
    %v971 = vsel %vm907, %v607, -inf
    %v972 = vsel %vm908, %v608, -inf
    %v973 = vsel %vm909, %v609, -inf
    %v974 = vsel %vm910, %v610, -inf
    %v975 = vsel %vm911, %v611, -inf
    %v976 = vsel %vm912, %v612, -inf
    %v977 = vsel %vm913, %v613, -inf
    %v978 = vsel %vm914, %v614, -inf
    %v979 = vsel %vm915, %v615, -inf
    %v980 = vsel %vm916, %v616, -inf
    %v981 = vsel %vm917, %v617, -inf
    %v982 = vsel %vm918, %v618, -inf
    %v983 = vsel %vm919, %v619, -inf
    %v984 = vsel %vm920, %v620, -inf
    %v985 = vsel %vm921, %v621, -inf
    %v986 = vsel %vm922, %v622, -inf
    %v987 = vsel %vm923, %v623, -inf
    %v988 = vsel %vm924, %v624, -inf
    %v989 = vsel %vm925, %v625, -inf
    %v990 = vsel %vm926, %v626, -inf
    %v991 = vsel %vm927, %v627, -inf
    %v992 = vsel %vm928, %v628, -inf
    %v993 = vsel %vm929, %v629, -inf
    %v994 = vsel %vm930, %v630, -inf
    %v995 = vsel %vm931, %v631, -inf
    %v996 = vsel %vm932, %v632, -inf
    %v997 = vsel %vm933, %v633, -inf
    %v998 = vsel %vm934, %v634, -inf
    %v999 = vsel %vm935, %v635, -inf
    %v1000 = vsel %vm936, %v636, -inf
    %v1001 = vsel %vm937, %v637, -inf
    %v1002 = vsel %vm938, %v638, -inf
    %v1003 = vmax.f32 %v939, %v943
    %v1004 = vmax.f32 %v941, %v945
    %v1005 = vmax.f32 %v1003, %v947
    %v1006 = vmax.f32 %v1004, %v949
    %v1007 = vmax.f32 %v1005, %v951
    %v1008 = vmax.f32 %v1006, %v953
    %v1009 = vmax.f32 %v1007, %v955
    %v1010 = vmax.f32 %v1008, %v957
    %v1011 = vmax.f32 %v1009, %v959
    %v1012 = vmax.f32 %v1010, %v961
    %v1013 = vmax.f32 %v1011, %v963
    %v1014 = vmax.f32 %v1012, %v965
    %v1015 = vmax.f32 %v1013, %v967
    %v1016 = vmax.f32 %v1014, %v969
    %v1017 = vmax.f32 %v1015, %v971
    %v1018 = vmax.f32 %v1016, %v973
    %v1019 = vmax.f32 %v1017, %v975
    %v1020 = vmax.f32 %v1018, %v977
    %v1021 = vmax.f32 %v1019, %v979
    %v1022 = vmax.f32 %v1020, %v981
    %v1023 = vmax.f32 %v1021, %v983
    %v1024 = vmax.f32 %v1022, %v985
    %v1025 = vmax.f32 %v1023, %v987
    %v1026 = vmax.f32 %v1024, %v989
    %v1027 = vmax.f32 %v1025, %v991
    %v1028 = vmax.f32 %v1026, %v993
    %v1029 = vmax.f32 %v1027, %v995
    %v1030 = vmax.f32 %v1028, %v997
    %v1031 = vmax.f32 %v1029, %v999
    %v1032 = vmax.f32 %v1030, %v1001
    %v1033 = vmax.f32 %v1031, %v1032
    %v1034 = vrot.slane %v1033, 4
    %v1035 = vmax.f32 %v1033, %v1034
    %v1036 = vrot.slane %v1035, 2
    %v1037 = vmax.f32 %v1035, %v1036
    %v1038 = vrot.slane %v1037, 1
    %v1039 = vmax.f32 %v1037, %v1038
    %v1040 = vmax.f32 %v940, %v944
    %v1041 = vmax.f32 %v942, %v946
    %v1042 = vmax.f32 %v1040, %v948
    %v1043 = vmax.f32 %v1041, %v950
    %v1044 = vmax.f32 %v1042, %v952
    %v1045 = vmax.f32 %v1043, %v954
    %v1046 = vmax.f32 %v1044, %v956
    %v1047 = vmax.f32 %v1045, %v958
    %v1048 = vmax.f32 %v1046, %v960
    %v1049 = vmax.f32 %v1047, %v962
    %v1050 = vmax.f32 %v1048, %v964
    %v1051 = vmax.f32 %v1049, %v966
    %v1052 = vmax.f32 %v1050, %v968
    %v1053 = vmax.f32 %v1051, %v970
    %v1054 = vmax.f32 %v1052, %v972
    %v1055 = vmax.f32 %v1053, %v974
    %v1056 = vmax.f32 %v1054, %v976
    %v1057 = vmax.f32 %v1055, %v978
    %v1058 = vmax.f32 %v1056, %v980
    %v1059 = vmax.f32 %v1057, %v982
    %v1060 = vmax.f32 %v1058, %v984
    %v1061 = vmax.f32 %v1059, %v986
    %v1062 = vmax.f32 %v1060, %v988
    %v1063 = vmax.f32 %v1061, %v990
    %v1064 = vmax.f32 %v1062, %v992
    %v1065 = vmax.f32 %v1063, %v994
    %v1066 = vmax.f32 %v1064, %v996
    %v1067 = vmax.f32 %v1065, %v998
    %v1068 = vmax.f32 %v1066, %v1000
    %v1069 = vmax.f32 %v1067, %v1002
    %v1070 = vmax.f32 %v1068, %v1069
    %v1071 = vrot.slane %v1070, 4
    %v1072 = vmax.f32 %v1070, %v1071
    %v1073 = vrot.slane %v1072, 2
    %v1074 = vmax.f32 %v1072, %v1073
    %v1075 = vrot.slane %v1074, 1
    %v1076 = vmax.f32 %v1074, %v1075
    %v1079 = vcombine.low %v1039, %v1076
    %v1081 = vunpack.c.l.s4 1966171168
    %v1082 = vunpack.c.0.s8 %v1081
    %v1083 = vlaneseq
    %v1084 = vshrl.u32 %v1083, 7
    %v1085 = vsub.s32 %v1082, %v1084
    %v1086 = vrot.slane %v1079, %v1085
    %v1088 = vunpack.c.l.s4 1966171168
    %v1089 = vunpack.c.0.s8 %v1088
    %v1090 = vlaneseq
    %v1091 = vshrl.u32 %v1090, 7
    %v1092 = vsub.s32 %v1089, %v1091
    %v1093 = vrot.slane %v1086, %v1092
    %v1095 = vlaneseq
    %vm1096 = vcmp.ge.s32.totalorder %v1095, 0
    %vm1097 = vcmp.lt.s32.totalorder %v1095, 256
    %vm1098 = vmand %vm1096, %vm1097
    %1099 = vst.msk [vmem:[#allocation10] sm:$0x3] %vm1098, %v1093
    %v1100 = vmax.f32 %v939, %v940
    %1101 = vmax.xlane.f32.xlu0 %v1100
    %v1102 = vpop.xlane.xlu0 %1101
    %v1103 = vmax.f32 %v941, %v942
    %1104 = vmax.xlane.f32.xlu0 %v1103
    %v1105 = vpop.xlane.xlu0 %1104
    %v1106 = vmax.f32 %v943, %v944
    %1107 = vmax.xlane.f32.xlu0 %v1106
    %v1108 = vpop.xlane.xlu0 %1107
    %v1109 = vmax.f32 %v945, %v946
    %1110 = vmax.xlane.f32.xlu0 %v1109
    %v1111 = vpop.xlane.xlu0 %1110
    %v1112 = vmax.f32 %v947, %v948
    %1113 = vmax.xlane.f32.xlu0 %v1112
    %v1114 = vpop.xlane.xlu0 %1113
    %v1115 = vmax.f32 %v949, %v950
    %1116 = vmax.xlane.f32.xlu0 %v1115
    %v1117 = vpop.xlane.xlu0 %1116
    %v1118 = vmax.f32 %v951, %v952
    %1119 = vmax.xlane.f32.xlu0 %v1118
    %v1120 = vpop.xlane.xlu0 %1119
    %v1121 = vmax.f32 %v953, %v954
    %1122 = vmax.xlane.f32.xlu0 %v1121
    %v1123 = vpop.xlane.xlu0 %1122
    %v1124 = vmax.f32 %v955, %v956
    %1125 = vmax.xlane.f32.xlu0 %v1124
    %v1126 = vpop.xlane.xlu0 %1125
    %v1127 = vmax.f32 %v957, %v958
    %1128 = vmax.xlane.f32.xlu0 %v1127
    %v1129 = vpop.xlane.xlu0 %1128
    %v1130 = vmax.f32 %v959, %v960
    %1131 = vmax.xlane.f32.xlu0 %v1130
    %v1132 = vpop.xlane.xlu0 %1131
    %v1133 = vmax.f32 %v961, %v962
    %1134 = vmax.xlane.f32.xlu0 %v1133
    %v1135 = vpop.xlane.xlu0 %1134
    %v1136 = vmax.f32 %v963, %v964
    %1137 = vmax.xlane.f32.xlu0 %v1136
    %v1138 = vpop.xlane.xlu0 %1137
    %v1139 = vmax.f32 %v965, %v966
    %1140 = vmax.xlane.f32.xlu0 %v1139
    %v1141 = vpop.xlane.xlu0 %1140
    %v1142 = vmax.f32 %v967, %v968
    %1143 = vmax.xlane.f32.xlu0 %v1142
    %v1144 = vpop.xlane.xlu0 %1143
    %v1145 = vmax.f32 %v969, %v970
    %1146 = vmax.xlane.f32.xlu0 %v1145
    %v1147 = vpop.xlane.xlu0 %1146
    %v1148 = vmax.f32 %v971, %v972
    %1149 = vmax.xlane.f32.xlu0 %v1148
    %v1150 = vpop.xlane.xlu0 %1149
    %v1151 = vmax.f32 %v973, %v974
    %1152 = vmax.xlane.f32.xlu0 %v1151
    %v1153 = vpop.xlane.xlu0 %1152
    %v1154 = vmax.f32 %v975, %v976
    %1155 = vmax.xlane.f32.xlu0 %v1154
    %v1156 = vpop.xlane.xlu0 %1155
    %v1157 = vmax.f32 %v977, %v978
    %1158 = vmax.xlane.f32.xlu0 %v1157
    %v1159 = vpop.xlane.xlu0 %1158
    %v1160 = vmax.f32 %v979, %v980
    %1161 = vmax.xlane.f32.xlu0 %v1160
    %v1162 = vpop.xlane.xlu0 %1161
    %v1163 = vmax.f32 %v981, %v982
    %1164 = vmax.xlane.f32.xlu0 %v1163
    %v1165 = vpop.xlane.xlu0 %1164
    %v1166 = vmax.f32 %v983, %v984
    %1167 = vmax.xlane.f32.xlu0 %v1166
    %v1168 = vpop.xlane.xlu0 %1167
    %v1169 = vmax.f32 %v985, %v986
    %1170 = vmax.xlane.f32.xlu0 %v1169
    %v1171 = vpop.xlane.xlu0 %1170
    %v1172 = vmax.f32 %v987, %v988
    %1173 = vmax.xlane.f32.xlu0 %v1172
    %v1174 = vpop.xlane.xlu0 %1173
    %v1175 = vmax.f32 %v989, %v990
    %1176 = vmax.xlane.f32.xlu0 %v1175
    %v1177 = vpop.xlane.xlu0 %1176
    %v1178 = vmax.f32 %v991, %v992
    %1179 = vmax.xlane.f32.xlu0 %v1178
    %v1180 = vpop.xlane.xlu0 %1179
    %v1181 = vmax.f32 %v993, %v994
    %1182 = vmax.xlane.f32.xlu0 %v1181
    %v1183 = vpop.xlane.xlu0 %1182
    %v1184 = vmax.f32 %v995, %v996
    %1185 = vmax.xlane.f32.xlu0 %v1184
    %v1186 = vpop.xlane.xlu0 %1185
    %v1187 = vmax.f32 %v997, %v998
    %1188 = vmax.xlane.f32.xlu0 %v1187
    %v1189 = vpop.xlane.xlu0 %1188
    %v1190 = vmax.f32 %v999, %v1000
    %1191 = vmax.xlane.f32.xlu0 %v1190
    %v1192 = vpop.xlane.xlu0 %1191
    %v1193 = vmax.f32 %v1001, %v1002
    %1194 = vmax.xlane.f32.xlu0 %v1193
    %v1195 = vpop.xlane.xlu0 %1194
    %vm1196 = vcmask 7168
    %1197 = vst.msk [vmem:[#allocation11] sm:$0xff] %vm1196, %v1102
    %1198 = vst.msk [vmem:[#allocation11 + $0x8] sm:$0xff] %vm1196, %v1105
    %1199 = vst.msk [vmem:[#allocation11 + $0x10] sm:$0xff] %vm1196, %v1108
    %1200 = vst.msk [vmem:[#allocation11 + $0x18] sm:$0xff] %vm1196, %v1111
    %1201 = vst.msk [vmem:[#allocation11 + $0x20] sm:$0xff] %vm1196, %v1114
    %1202 = vst.msk [vmem:[#allocation11 + $0x28] sm:$0xff] %vm1196, %v1117
    %1203 = vst.msk [vmem:[#allocation11 + $0x30] sm:$0xff] %vm1196, %v1120
    %1204 = vst.msk [vmem:[#allocation11 + $0x38] sm:$0xff] %vm1196, %v1123
    %1205 = vst.msk [vmem:[#allocation11 + $0x40] sm:$0xff] %vm1196, %v1126
    %1206 = vst.msk [vmem:[#allocation11 + $0x48] sm:$0xff] %vm1196, %v1129
    %1207 = vst.msk [vmem:[#allocation11 + $0x50] sm:$0xff] %vm1196, %v1132
    %1208 = vst.msk [vmem:[#allocation11 + $0x58] sm:$0xff] %vm1196, %v1135
    %1209 = vst.msk [vmem:[#allocation11 + $0x60] sm:$0xff] %vm1196, %v1138
    %1210 = vst.msk [vmem:[#allocation11 + $0x68] sm:$0xff] %vm1196, %v1141
    %1211 = vst.msk [vmem:[#allocation11 + $0x70] sm:$0xff] %vm1196, %v1144
    %1212 = vst.msk [vmem:[#allocation11 + $0x78] sm:$0xff] %vm1196, %v1147
    %1213 = vst.msk [vmem:[#allocation11 + $0x80] sm:$0xff] %vm1196, %v1150
    %1214 = vst.msk [vmem:[#allocation11 + $0x88] sm:$0xff] %vm1196, %v1153
    %1215 = vst.msk [vmem:[#allocation11 + $0x90] sm:$0xff] %vm1196, %v1156
    %1216 = vst.msk [vmem:[#allocation11 + $0x98] sm:$0xff] %vm1196, %v1159
    %1217 = vst.msk [vmem:[#allocation11 + $0xa0] sm:$0xff] %vm1196, %v1162
    %1218 = vst.msk [vmem:[#allocation11 + $0xa8] sm:$0xff] %vm1196, %v1165
    %1219 = vst.msk [vmem:[#allocation11 + $0xb0] sm:$0xff] %vm1196, %v1168
    %1220 = vst.msk [vmem:[#allocation11 + $0xb8] sm:$0xff] %vm1196, %v1171
    %1221 = vst.msk [vmem:[#allocation11 + $0xc0] sm:$0xff] %vm1196, %v1174
    %1222 = vst.msk [vmem:[#allocation11 + $0xc8] sm:$0xff] %vm1196, %v1177
    %1223 = vst.msk [vmem:[#allocation11 + $0xd0] sm:$0xff] %vm1196, %v1180
    %1224 = vst.msk [vmem:[#allocation11 + $0xd8] sm:$0xff] %vm1196, %v1183
    %1225 = vst.msk [vmem:[#allocation11 + $0xe0] sm:$0xff] %vm1196, %v1186
    %1226 = vst.msk [vmem:[#allocation11 + $0xe8] sm:$0xff] %vm1196, %v1189
    %1227 = vst.msk [vmem:[#allocation11 + $0xf0] sm:$0xff] %vm1196, %v1192
    %1228 = vst.msk [vmem:[#allocation11 + $0xf8] sm:$0xff] %vm1196, %v1195
    // Predicated region
    $region18: #{lm_regular_product.5} parent=1 // pred_check
      _
    $region19: #{lm_regular_product.5} parent=1 // pred_check_branch
      %1230 = sbr.rel (0) target = $region21
    $region20: #{lm_regular_product.5} parent=1 // pred_region
      %s1232 = ssub.s32 32, 32
      %1233 = vsyncadd [#allocation7], %s1232
      %s1235 = sshll.u32 [#allocation10], 4
      %s1236 = int_to_ptr.vmem [resolvable:$true] %s1235
      %1238 = dma.vmem_to_hbm [thread:$0]  %s1236, 32, %s4, [#allocation7]
    $region21: #{lm_regular_product.5} parent=1 // pred_fallthru
      _
    // Predicated region
    $region22: #{lm_regular_product.5} parent=1 // pred_check
      _
    $region23: #{lm_regular_product.5} parent=1 // pred_check_branch
      %1240 = sbr.rel (0) target = $region25
    $region24: #{lm_regular_product.5} parent=1 // pred_region
      %s1242 = ssub.s32 4096, 4096
      %1243 = vsyncadd [#allocation12], %s1242
      %s1244 = sshll.u32 [#allocation11], 4
      %s1245 = int_to_ptr.vmem [resolvable:$true] %s1244
      %1250 = dma.vmem_to_hbm [thread:$0]  %s1245, 4096, %s5, [#allocation12], 128, 128, 8
    $region25: #{lm_regular_product.5} parent=1 // pred_fallthru
      _
    // Predicated region
    $region26: #{lm_regular_product.5} parent=1 // pred_check
      _
    $region27: #{lm_regular_product.5} parent=1 // pred_check_branch
      %1252 = sbr.rel (0) target = $region29
    $region28: #{lm_regular_product.5} parent=1 // pred_region
      %1253 = dma.done [#allocation7], 32
    $region29: #{lm_regular_product.5} parent=1 // pred_fallthru
      _
    // Predicated region
    $region30: #{lm_regular_product.5} parent=1 // pred_check
      _
    $region31: #{lm_regular_product.5} parent=1 // pred_check_branch
      %1255 = sbr.rel (0) target = $region33
    $region32: #{lm_regular_product.5} parent=1 // pred_region
      %1256 = dma.done [#allocation12], 4096
    $region33: #{lm_regular_product.5} parent=1 // pred_fallthru
      _
    %1257 = vsyncpa [#allocation6], 1
    %1258 = vsyncpa [#allocation9], 1
    %1259 = vsyncpa [#allocation7], 1
    %1260 = vsyncpa [#allocation12], 1

</llo_original>
